<compile_context>
chip_gen: v7x
topology: tpu7x:2x2x1
jax: 0.10.0
libtpu: 0.0.40
codegen_flags: <defaults>
</compile_context>

<pallas_src>
import functools

import jax
import jax.numpy as jnp
from jax import lax
from jax.experimental import pallas as pl
from jax.experimental.pallas import tpu as pltpu


def _round_up(v, m):
    return (v + m - 1) // m * m


def _vmem_limit_bytes():
    """Generation-aware VMEM budget: ~3/4 of physical capacity.

    v5e/v6e (128 MiB) -> ~96 MiB; v7x (64 MiB) -> ~48 MiB. Falls back to a
    conservative 48 MiB if the hardware query is unavailable.
    """
    cap = 64 * 1024 * 1024
    try:
        info = pltpu.get_tpu_info()
        cap = int(getattr(info, "vmem_capacity_bytes", cap)) or cap
    except Exception:
        pass
    cap = max(32 * 1024 * 1024, min(cap, 128 * 1024 * 1024))
    return (cap // 4) * 3


_VMEM_LIMIT = _vmem_limit_bytes()


# --------------------- fused (LN) + matmul + epilogue kernel ----------------

def _fused_matmul_kernel(*refs, has_ln, has_bias, has_residual, activation,
                         eps=1e-5):
    it = iter(refs)
    x_ref = next(it)
    w_ref = next(it)
    g_ref = next(it) if has_ln else None
    be_ref = next(it) if has_ln else None
    bias_ref = next(it) if has_bias else None
    res_ref = next(it) if has_residual else None
    o_ref = next(it)

    if has_ln:
        # LayerNorm prologue: stats in f32, bf16 operand into the MXU.
        # (With the full-width weight path there is a single column tile, so
        # this runs exactly once per row tile.)
        xf = x_ref[...].astype(jnp.float32)
        mean = jnp.mean(xf, axis=-1, keepdims=True)
        var = jnp.mean(jnp.square(xf - mean), axis=-1, keepdims=True)
        xf = (xf - mean) * lax.rsqrt(var + eps)
        xf = xf * g_ref[...].astype(jnp.float32) + be_ref[...].astype(jnp.float32)
        x = xf.astype(jnp.bfloat16)
    else:
        x = x_ref[...]                                    # already bf16

    y = jnp.dot(x, w_ref[...], preferred_element_type=jnp.float32)
    if has_bias:
        y = y + bias_ref[...].astype(jnp.float32)
    if activation == "quick_gelu":                        # CLIP QuickGELU
        y = y * jax.nn.sigmoid(1.702 * y)
    if has_residual:
        y = y + res_ref[...].astype(jnp.float32)
    o_ref[...] = y.astype(o_ref.dtype)


def fused_matmul(x, w, *, bias=None, residual=None, ln=None, activation="none",
                 out_dtype=jnp.bfloat16, tm=256, tn=None):
    """y = act(LN(x) @ w + bias) + residual.

    Grid is (col_tiles, row_tiles) with rows innermost, so the (K, tn) weight
    block index only changes on the outer axis and the block stays resident in
    VMEM across the entire row sweep (DMA'd num_col_tiles times total, not
    once per row tile). When the double-buffered full weight fits the VMEM
    budget, tn = n_cols so the weight is fetched exactly once and the fused LN
    prologue runs once per row tile.
    """
    n_rows, k = x.shape
    kw, n_cols = w.shape
    assert k == kw

    has_ln = ln is not None
    has_bias = bias is not None
    has_residual = residual is not None

    x = x.astype(jnp.bfloat16)
    w = w.astype(jnp.bfloat16)

    # Pad the contraction dim to a multiple of 128 (exact: zeros). Skipped when
    # LN is fused because the LN statistics need the true row length.
    if not has_ln and k % 128 != 0:
        k_p = _round_up(k, 128)
        x = jnp.pad(x, ((0, 0), (0, k_p - k)))
        w = jnp.pad(w, ((0, k_p - k), (0, 0)))
        k = k_p

    # Row tiling (sublane multiples of 8); pad with zeros, slice afterwards.
    tm = min(tm, _round_up(n_rows, 8))
    rows_p = _round_up(n_rows, tm)
    if rows_p != n_rows:
        x = jnp.pad(x, ((0, rows_p - n_rows), (0, 0)))
        if has_residual:
            residual = jnp.pad(residual.astype(jnp.bfloat16),
                               ((0, rows_p - n_rows), (0, 0)))
    elif has_residual:
        residual = residual.astype(jnp.bfloat16)

    # Column tiling: prefer full-weight residency when it fits the budget.
    out_bytes = jnp.dtype(out_dtype).itemsize
    if tn is None:
        full_footprint = (2 * (tm * k + k * n_cols + tm * n_cols) * 2
                          + 2 * tm * n_cols * out_bytes)
        tn = n_cols if full_footprint <= (_VMEM_LIMIT * 3) // 4 else 512
    if n_cols <= tn:
        tn = n_cols
        cols_p = n_cols
    else:
        cols_p = _round_up(n_cols, tn)
        if cols_p != n_cols:
            w = jnp.pad(w, ((0, 0), (0, cols_p - n_cols)))
            if has_bias:
                bias = jnp.pad(bias, ((0, cols_p - n_cols),))
            if has_residual:
                residual = jnp.pad(residual, ((0, 0), (0, cols_p - n_cols)))

    grid = (cols_p // tn, rows_p // tm)        # rows innermost -> weight held

    in_specs = [
        pl.BlockSpec((tm, k), lambda c, r: (r, 0)),
        pl.BlockSpec((k, tn), lambda c, r: (0, c)),
    ]
    inputs = [x, w]
    if has_ln:
        g, bvec = ln
        in_specs += [pl.BlockSpec((1, k), lambda c, r: (0, 0)),
                     pl.BlockSpec((1, k), lambda c, r: (0, 0))]
        inputs += [g.astype(jnp.float32).reshape(1, k),
                   bvec.astype(jnp.float32).reshape(1, k)]
    if has_bias:
        in_specs.append(pl.BlockSpec((1, tn), lambda c, r: (0, c)))
        inputs.append(bias.astype(jnp.float32).reshape(1, cols_p))
    if has_residual:
        in_specs.append(pl.BlockSpec((tm, tn), lambda c, r: (r, c)))
        inputs.append(residual)

    kernel = functools.partial(
        _fused_matmul_kernel, has_ln=has_ln, has_bias=has_bias,
        has_residual=has_residual, activation=activation)

    flops = 2 * rows_p * cols_p * k
    transcendentals = rows_p * cols_p if activation == "quick_gelu" else 0
    bytes_accessed = 2 * (rows_p * k + k * cols_p + rows_p * cols_p)

    out = pl.pallas_call(
        kernel,
        out_shape=jax.ShapeDtypeStruct((rows_p, cols_p), out_dtype),
        grid=grid,
        in_specs=in_specs,
        out_specs=pl.BlockSpec((tm, tn), lambda c, r: (r, c)),
        compiler_params=pltpu.CompilerParams(
            dimension_semantics=("parallel", "parallel"),
            vmem_limit_bytes=_VMEM_LIMIT),
        cost_estimate=pl.CostEstimate(
            flops=flops, transcendentals=transcendentals,
            bytes_accessed=bytes_accessed),
    )(*inputs)
    return out[:n_rows, :n_cols]


# ---------------- fused (+pos embedding) ln_pre kernel ----------------------
# ln_pre's output IS the residual-stream input, so it cannot be folded into a
# following matmul prologue; instead the positional-embedding add is fused in
# here so the bf16 activation stream never round-trips HBM in f32.

def _add_pos_layernorm_kernel(x_ref, pos_ref, g_ref, b_ref, o_ref, *, eps):
    x = x_ref[0].astype(jnp.float32) + pos_ref[...].astype(jnp.float32)
    mean = jnp.mean(x, axis=-1, keepdims=True)
    var = jnp.mean(jnp.square(x - mean), axis=-1, keepdims=True)
    xn = (x - mean) * lax.rsqrt(var + eps)
    o_ref[0] = (xn * g_ref[...].astype(jnp.float32)
                + b_ref[...].astype(jnp.float32)).astype(o_ref.dtype)


def add_pos_layernorm(x, pos, gamma, beta, *, eps=1e-5, out_dtype=jnp.bfloat16):
    """LN(x + pos) over [B, S, D]; grid parallel over batch."""
    b, s, d = x.shape
    return pl.pallas_call(
        functools.partial(_add_pos_layernorm_kernel, eps=eps),
        out_shape=jax.ShapeDtypeStruct((b, s, d), out_dtype),
        grid=(b,),
        in_specs=[pl.BlockSpec((1, s, d), lambda i: (i, 0, 0)),
                  pl.BlockSpec((s, d), lambda i: (0, 0)),
                  pl.BlockSpec((1, d), lambda i: (0, 0)),
                  pl.BlockSpec((1, d), lambda i: (0, 0))],
        out_specs=pl.BlockSpec((1, s, d), lambda i: (i, 0, 0)),
        compiler_params=pltpu.CompilerParams(
            dimension_semantics=("parallel",),
            vmem_limit_bytes=_VMEM_LIMIT),
    )(x.astype(jnp.bfloat16), pos.astype(jnp.float32),
      gamma.astype(jnp.float32).reshape(1, d),
      beta.astype(jnp.float32).reshape(1, d))


# ------------- fused attention + out-projection + residual kernel -----------

def _attention_block_kernel(qkv_ref, wout_ref, bout_ref, res_ref, o_ref, *,
                            heads, head_dim):
    d = heads * head_dim
    qkv = qkv_ref[0]                       # (S, 3D) bf16 — q rows pre-scaled
    s_len = qkv.shape[0]

    # Head split via lane slices + stack on a new leading (batch) dim — avoids
    # minor-dim reshapes; all heads then go through ONE batched MXU op each.
    def split(base):
        return jnp.stack(
            [qkv[:, base + h * head_dim:base + (h + 1) * head_dim]
             for h in range(heads)], axis=0)              # (H, S, Dh) bf16

    q = split(0)
    k = split(d)
    v = split(2 * d)

    # (H, S, S) scores, batched over heads (scale already folded into q).
    scores = lax.dot_general(q, k, (((2,), (2,)), ((0,), (0,))),
                             preferred_element_type=jnp.float32)
    scores = scores - jnp.max(scores, axis=-1, keepdims=True)
    p = jnp.exp(scores)
    denom = jnp.sum(p, axis=-1, keepdims=True)            # (H, S, 1)

    # PV first; normalize AFTER on the (H,S,Dh) context (EUP reciprocal).
    ctx = lax.dot_general(p.astype(jnp.bfloat16), v,
                          (((2,), (1,)), ((0,), (0,))),
                          preferred_element_type=jnp.float32)     # (H, S, Dh)
    ctx = ctx * pl.reciprocal(denom, approx=True)

    # Head merge + out-projection without lane-merging reshapes:
    #   concat_h(ctx_h) @ W_out == sum_h ctx_h @ W_out[h*Dh:(h+1)*Dh, :]
    wout3 = jnp.stack([wout_ref[h * head_dim:(h + 1) * head_dim, :]
                       for h in range(heads)], axis=0)            # (H, Dh, D)
    proj = lax.dot_general(ctx.astype(jnp.bfloat16), wout3,
                           (((2,), (1,)), ((0,), (0,))),
                           preferred_element_type=jnp.float32)    # (H, S, D)
    out = jnp.sum(proj, axis=0)                                   # (S, D) f32
    out = out + bout_ref[...].astype(jnp.float32) + res_ref[0].astype(jnp.float32)
    o_ref[0] = out.astype(o_ref.dtype)


def attention_block(qkv, w_out, b_out, x_res, *, heads, head_dim):
    """Fused MHA + out-proj + bias + residual. qkv:[B,S,3D] -> [B,S,D] bf16."""
    # TODO(synk): for long sequences / v7x dual-core at small batch, add a
    # second parallel grid axis over query-row tiles (flash-style online
    # softmax) instead of grid=(b,) only.
    b, s, d3 = qkv.shape
    d = heads * head_dim
    kernel = functools.partial(_attention_block_kernel, heads=heads,
                               head_dim=head_dim)
    flops = 4 * b * heads * s * s * head_dim + 2 * b * s * d * d
    return pl.pallas_call(
        kernel,
        out_shape=jax.ShapeDtypeStruct((b, s, d), jnp.bfloat16),
        grid=(b,),
        in_specs=[
            pl.BlockSpec((1, s, d3), lambda i: (i, 0, 0)),
            pl.BlockSpec((d, d), lambda i: (0, 0)),
            pl.BlockSpec((1, d), lambda i: (0, 0)),
            pl.BlockSpec((1, s, d), lambda i: (i, 0, 0)),
        ],
        out_specs=pl.BlockSpec((1, s, d), lambda i: (i, 0, 0)),
        compiler_params=pltpu.CompilerParams(
            dimension_semantics=("parallel",),
            vmem_limit_bytes=_VMEM_LIMIT),
        cost_estimate=pl.CostEstimate(
            flops=flops, transcendentals=b * heads * s * s,
            bytes_accessed=2 * (b * s * (d3 + 2 * d) + d * d)),
    )(qkv.astype(jnp.bfloat16), w_out.astype(jnp.bfloat16),
      b_out.astype(jnp.float32).reshape(1, d), x_res.astype(jnp.bfloat16))


# --------------------------- Synthetic CLIP ViT ----------------------------

class Config:
    batch = 2
    in_channels = 3
    image_size = 16
    patch_size = 8
    width = 64          # hidden D
    heads = 2
    head_dim = 32
    mlp_dim = 256
    layers = 2
    output_dim = 32


def init_params(key, cfg):
    c, p, d = cfg.in_channels, cfg.patch_size, cfg.width
    grid = cfg.image_size // p
    seq = grid * grid + 1
    std = 0.02

    def nrm(k, shape, s=std):
        return (s * jax.random.normal(k, shape)).astype(jnp.float32)

    keys = iter(jax.random.split(key, 8 + cfg.layers * 12))
    params = {
        "conv1_w": nrm(next(keys), (d, c, p, p)),              # NCHW conv weight
        "class_embedding": nrm(next(keys), (d,)),
        "pos_embedding": nrm(next(keys), (seq, d)),
        "ln_pre_g": jnp.ones((d,), jnp.float32),
        "ln_pre_b": jnp.zeros((d,), jnp.float32),
        "ln_post_g": jnp.ones((d,), jnp.float32),
        "ln_post_b": jnp.zeros((d,), jnp.float32),
        "proj": nrm(next(keys), (d, cfg.output_dim)),
        "layers": [],
    }
    for _ in range(cfg.layers):
        layer = {
            "ln1_g": jnp.ones((d,), jnp.float32),
            "ln1_b": jnp.zeros((d,), jnp.float32),
            "w_qkv": nrm(next(keys), (d, 3 * d)),
            "b_qkv": jnp.zeros((3 * d,), jnp.float32),
            "w_out": nrm(next(keys), (d, d)),
            "b_out": jnp.zeros((d,), jnp.float32),
            "ln2_g": jnp.ones((d,), jnp.float32),
            "ln2_b": jnp.zeros((d,), jnp.float32),
            "w_fc": nrm(next(keys), (d, cfg.mlp_dim)),
            "b_fc": jnp.zeros((cfg.mlp_dim,), jnp.float32),
            "w_proj": nrm(next(keys), (cfg.mlp_dim, d)),
            "b_proj": jnp.zeros((d,), jnp.float32),
        }
        params["layers"].append(layer)
    return params


def cast_params(params, cfg):
    """Cast matmul weights to bf16 once; fold softmax scale into w_qkv/b_qkv."""
    c, p, d = cfg.in_channels, cfg.patch_size, cfg.width
    scale = float(cfg.head_dim) ** -0.5
    out = dict(params)
    out["w_patch"] = params["conv1_w"].reshape(d, c * p * p).T.astype(jnp.bfloat16)
    del out["conv1_w"]
    out["proj"] = params["proj"].astype(jnp.bfloat16)
    # 1/sqrt(Dh) applied to the q third of the QKV projection, once, at init.
    qkv_scale = jnp.concatenate([jnp.full((d,), scale, jnp.float32),
                                 jnp.ones((2 * d,), jnp.float32)])
    layers = []
    for layer in params["layers"]:
        l = dict(layer)
        l["w_qkv"] = (layer["w_qkv"] * qkv_scale[None, :]).astype(jnp.bfloat16)
        l["b_qkv"] = layer["b_qkv"] * qkv_scale
        for name in ("w_out", "w_fc", "w_proj"):
            l[name] = layer[name].astype(jnp.bfloat16)
        layers.append(l)
    out["layers"] = layers
    return out


def encode_image(image, params, cfg):
    """Equivalent of CLIP ViT model.encode_image(image). image: NCHW float32."""
    b, c, h, w = image.shape
    p = cfg.patch_size
    d = cfg.width
    gh, gw = h // p, w // p
    n_patches = gh * gw
    seq = n_patches + 1

    # conv1 (kernel=stride=patch, bias=False) == matmul on flattened patches.
    patches = image.reshape(b, c, gh, p, gw, p)
    patches = patches.transpose(0, 2, 4, 1, 3, 5).reshape(b * n_patches, c * p * p)
    x = fused_matmul(patches, params["w_patch"])          # [B*P, D] bf16 (stays bf16)

    # class-token concat (tiny bf16 XLA op); the +pos_embedding add is fused
    # into the ln_pre kernel below — no f32 [B,S,D] round trip.
    cls_tok = jnp.broadcast_to(params["class_embedding"].astype(jnp.bfloat16),
                               (b, 1, d))
    x3d = jnp.concatenate([cls_tok, x.reshape(b, n_patches, d)], axis=1)

    # ln_pre (+ pos add). Its output is the residual-stream input.
    x3d = add_pos_layernorm(x3d, params["pos_embedding"],
                            params["ln_pre_g"], params["ln_pre_b"])  # bf16 [B,S,D]
    x2d = x3d.reshape(b * seq, d)

    for layer in params["layers"]:
        # --- attention block: (LN1 + QKV) then (attn + out-proj + residual) ---
        qkv = fused_matmul(x2d, layer["w_qkv"], bias=layer["b_qkv"],
                           ln=(layer["ln1_g"], layer["ln1_b"]))   # [B*S, 3D] bf16
        x3d = attention_block(qkv.reshape(b, seq, 3 * d),
                              layer["w_out"], layer["b_out"], x3d,
                              heads=cfg.heads, head_dim=cfg.head_dim)
        x2d = x3d.reshape(b * seq, d)

        # --- MLP block: (LN2 + fc + QuickGELU) then (proj + residual) ---
        hdn = fused_matmul(x2d, layer["w_fc"], bias=layer["b_fc"],
                           ln=(layer["ln2_g"], layer["ln2_b"]),
                           activation="quick_gelu")               # [B*S, M] bf16
        x2d = fused_matmul(hdn, layer["w_proj"], bias=layer["b_proj"],
                           residual=x2d)                          # [B*S, D] bf16
        x3d = x2d.reshape(b, seq, d)

    # ln_post on CLS token fused with the final projection (no bias).
    cls_out = x3d[:, 0, :]                                        # [B, D] bf16
    features = fused_matmul(cls_out, params["proj"],
                            ln=(params["ln_post_g"], params["ln_post_b"]),
                            out_dtype=jnp.float32)                # [B, out_dim]
    return features


# ------------------------------ entry point --------------------------------

if __name__ == "__main__":
    cfg = Config()
    key = jax.random.PRNGKey(0)
    k_img, k_params = jax.random.split(key)

    image = jax.random.normal(
        k_img, (cfg.batch, cfg.in_channels, cfg.image_size, cfg.image_size),
        dtype=jnp.float32)                                        # NCHW, like PyTorch
    params = cast_params(init_params(k_params, cfg), cfg)

    encode = jax.jit(functools.partial(encode_image, cfg=cfg))
    features = jax.block_until_ready(encode(image, params))

    assert features.shape == (cfg.batch, cfg.output_dim)
    assert bool(jnp.all(jnp.isfinite(features)))
    print("KERNEL_OK")
</pallas_src>

<mosaic_0001>
module attributes {stable_mosaic.version = 11 : i64} {
  func.func @_fused_matmul_kernel(%arg0: i32, %arg1: i32, %arg2: memref<8x256xbf16, #tpu.memory_space<vmem>>, %arg3: memref<256x64xbf16, #tpu.memory_space<vmem>>, %arg4: memref<8x64xbf16, #tpu.memory_space<vmem>>) attributes {dimension_semantics = [#tpu.dimension_semantics<parallel>, #tpu.dimension_semantics<parallel>], iteration_bounds = array<i64: 1, 1>, scalar_prefetch = 0 : i64, scratch_operands = 0 : i64, tpu.core_type = #tpu.core_type<tc>, window_params = [{transform_indices = @transform_0, window_bounds = array<i64: 8, 256>}, {transform_indices = @transform_1, window_bounds = array<i64: 256, 64>}, {transform_indices = @transform_2, window_bounds = array<i64: 8, 64>}]} {
    %c0 = arith.constant 0 : index
    %c0_0 = arith.constant 0 : index
    %0 = vector.load %arg2[%c0, %c0_0] : memref<8x256xbf16, #tpu.memory_space<vmem>>, vector<8x256xbf16>
    %c0_1 = arith.constant 0 : index
    %c0_2 = arith.constant 0 : index
    %1 = vector.load %arg3[%c0_1, %c0_2] : memref<256x64xbf16, #tpu.memory_space<vmem>>, vector<256x64xbf16>
    %cst = arith.constant dense<0.000000e+00> : vector<8x64xf32>
    %2 = tpu.matmul %0, %1, %cst {dimension_numbers = #tpu.dot_dimension_numbers<[1], [0], [0], [1], [0, 0, 1, 1], [], []>} : vector<8x256xbf16>, vector<256x64xbf16>, vector<8x64xf32> -> vector<8x64xf32>
    %3 = arith.truncf %2 : vector<8x64xf32> to vector<8x64xbf16>
    %c0_3 = arith.constant 0 : index
    %c0_4 = arith.constant 0 : index
    %4 = vector.load %arg4[%c0_3, %c0_4] : memref<8x64xbf16, #tpu.memory_space<vmem>>, vector<8x64xbf16>
    tpu.vector_store %arg4[%c0_3, %c0_4], %3 {strides = array<i32>} : memref<8x64xbf16, #tpu.memory_space<vmem>>, vector<8x64xbf16>,
    return
  }
  func.func @transform_0(%arg0: i32, %arg1: i32) -> (i32, i32) {
    %c0_i32 = arith.constant 0 : i32
    %c0_i32_0 = arith.constant 0 : i32
    return %arg1, %c0_i32 : i32, i32
  }
  func.func @transform_1(%arg0: i32, %arg1: i32) -> (i32, i32) {
    %c0_i32 = arith.constant 0 : i32
    %c0_i32_0 = arith.constant 0 : i32
    return %c0_i32, %arg0 : i32, i32
  }
  func.func @transform_2(%arg0: i32, %arg1: i32) -> (i32, i32) {
    %c0_i32 = arith.constant 0 : i32
    return %arg1, %arg0 : i32, i32
  }
}

module attributes {stable_mosaic.version = 11 : i64} {
  func.func @_add_pos_layernorm_kernel(%arg0: i32, %arg1: memref<1x5x64xbf16, #tpu.memory_space<vmem>>, %arg2: memref<5x64xf32, #tpu.memory_space<vmem>>, %arg3: memref<1x64xf32, #tpu.memory_space<vmem>>, %arg4: memref<1x64xf32, #tpu.memory_space<vmem>>, %arg5: memref<1x5x64xbf16, #tpu.memory_space<vmem>>) attributes {dimension_semantics = [#tpu.dimension_semantics<parallel>], iteration_bounds = array<i64: 2>, scalar_prefetch = 0 : i64, scratch_operands = 0 : i64, tpu.core_type = #tpu.core_type<tc>, window_params = [{transform_indices = @transform_0, window_bounds = array<i64: 1, 5, 64>}, {pipeline_mode = #tpu.pipeline_mode<synchronous>, transform_indices = @transform_1, window_bounds = array<i64: 5, 64>}, {pipeline_mode = #tpu.pipeline_mode<synchronous>, transform_indices = @transform_2, window_bounds = array<i64: 1, 64>}, {pipeline_mode = #tpu.pipeline_mode<synchronous>, transform_indices = @transform_3, window_bounds = array<i64: 1, 64>}, {transform_indices = @transform_4, window_bounds = array<i64: 1, 5, 64>}]} {
    %c0 = arith.constant 0 : index
    %c0_0 = arith.constant 0 : index
    %c0_1 = arith.constant 0 : index
    %0 = vector.load %arg1[%c0, %c0_0, %c0_1] : memref<1x5x64xbf16, #tpu.memory_space<vmem>>, vector<1x5x64xbf16>
    %1 = vector.shape_cast %0 : vector<1x5x64xbf16> to vector<5x64xbf16>
    %2 = arith.extf %1 : vector<5x64xbf16> to vector<5x64xf32>
    %c0_2 = arith.constant 0 : index
    %c0_3 = arith.constant 0 : index
    %3 = vector.load %arg2[%c0_2, %c0_3] : memref<5x64xf32, #tpu.memory_space<vmem>>, vector<5x64xf32>
    %4 = arith.addf %2, %3 : vector<5x64xf32>
    %cst = arith.constant dense<0.000000e+00> : vector<5xf32>
    %5 = vector.multi_reduction <add>, %4, %cst [1] : vector<5x64xf32> to vector<5xf32>
    %6 = vector.shape_cast %5 : vector<5xf32> to vector<5x1xf32>
    %cst_4 = arith.constant 6.400000e+01 : f32
    %7 = vector.broadcast %cst_4 : f32 to vector<5x1xf32>
    %8 = arith.divf %6, %7 : vector<5x1xf32>
    %9 = vector.broadcast %8 : vector<5x1xf32> to vector<5x64xf32>
    %10 = arith.subf %4, %9 : vector<5x64xf32>
    %11 = arith.mulf %10, %10 : vector<5x64xf32>
    %cst_5 = arith.constant dense<0.000000e+00> : vector<5xf32>
    %12 = vector.multi_reduction <add>, %11, %cst_5 [1] : vector<5x64xf32> to vector<5xf32>
    %13 = vector.shape_cast %12 : vector<5xf32> to vector<5x1xf32>
    %cst_6 = arith.constant 6.400000e+01 : f32
    %14 = vector.broadcast %cst_6 : f32 to vector<5x1xf32>
    %15 = arith.divf %13, %14 : vector<5x1xf32>
    %16 = vector.broadcast %8 : vector<5x1xf32> to vector<5x64xf32>
    %17 = arith.subf %4, %16 : vector<5x64xf32>
    %cst_7 = arith.constant 9.99999974E-6 : f32
    %18 = vector.broadcast %cst_7 : f32 to vector<5x1xf32>
    %19 = arith.addf %15, %18 : vector<5x1xf32>
    %20 = math.rsqrt %19 : vector<5x1xf32>
    %21 = vector.broadcast %20 : vector<5x1xf32> to vector<5x64xf32>
    %22 = arith.mulf %17, %21 : vector<5x64xf32>
    %c0_8 = arith.constant 0 : index
    %c0_9 = arith.constant 0 : index
    %23 = vector.load %arg3[%c0_8, %c0_9] : memref<1x64xf32, #tpu.memory_space<vmem>>, vector<1x64xf32>
    %24 = vector.broadcast %23 : vector<1x64xf32> to vector<5x64xf32>
    %25 = arith.mulf %22, %24 : vector<5x64xf32>
    %c0_10 = arith.constant 0 : index
    %c0_11 = arith.constant 0 : index
    %26 = vector.load %arg4[%c0_10, %c0_11] : memref<1x64xf32, #tpu.memory_space<vmem>>, vector<1x64xf32>
    %27 = vector.broadcast %26 : vector<1x64xf32> to vector<5x64xf32>
    %28 = arith.addf %25, %27 : vector<5x64xf32>
    %29 = arith.truncf %28 : vector<5x64xf32> to vector<5x64xbf16>
    %c0_12 = arith.constant 0 : index
    %c0_13 = arith.constant 0 : index
    %c0_14 = arith.constant 0 : index
    %30 = vector.load %arg5[%c0_12, %c0_13, %c0_14] : memref<1x5x64xbf16, #tpu.memory_space<vmem>>, vector<1x5x64xbf16>
    %31 = vector.shape_cast %30 : vector<1x5x64xbf16> to vector<5x64xbf16>
    %32 = vector.shape_cast %29 : vector<5x64xbf16> to vector<1x5x64xbf16>
    tpu.vector_store %arg5[%c0_12, %c0_13, %c0_14], %32 {strides = array<i32>} : memref<1x5x64xbf16, #tpu.memory_space<vmem>>, vector<1x5x64xbf16>,
    return
  }
  func.func @transform_0(%arg0: i32) -> (i32, i32, i32) {
    %c0_i32 = arith.constant 0 : i32
    %c0_i32_0 = arith.constant 0 : i32
    %c0_i32_1 = arith.constant 0 : i32
    return %arg0, %c0_i32, %c0_i32_0 : i32, i32, i32
  }
  func.func @transform_1(%arg0: i32) -> (i32, i32) {
    %c0_i32 = arith.constant 0 : i32
    %c0_i32_0 = arith.constant 0 : i32
    %c0_i32_1 = arith.constant 0 : i32
    return %c0_i32, %c0_i32_0 : i32, i32
  }
  func.func @transform_2(%arg0: i32) -> (i32, i32) {
    %c0_i32 = arith.constant 0 : i32
    %c0_i32_0 = arith.constant 0 : i32
    %c0_i32_1 = arith.constant 0 : i32
    return %c0_i32, %c0_i32_0 : i32, i32
  }
  func.func @transform_3(%arg0: i32) -> (i32, i32) {
    %c0_i32 = arith.constant 0 : i32
    %c0_i32_0 = arith.constant 0 : i32
    %c0_i32_1 = arith.constant 0 : i32
    return %c0_i32, %c0_i32_0 : i32, i32
  }
  func.func @transform_4(%arg0: i32) -> (i32, i32, i32) {
    %c0_i32 = arith.constant 0 : i32
    %c0_i32_0 = arith.constant 0 : i32
    %c0_i32_1 = arith.constant 0 : i32
    return %arg0, %c0_i32, %c0_i32_0 : i32, i32, i32
  }
}

module attributes {stable_mosaic.version = 11 : i64} {
  func.func @_attention_block_kernel(%arg0: i32, %arg1: memref<1x5x192xbf16, #tpu.memory_space<vmem>>, %arg2: memref<64x64xbf16, #tpu.memory_space<vmem>>, %arg3: memref<1x64xf32, #tpu.memory_space<vmem>>, %arg4: memref<1x5x64xbf16, #tpu.memory_space<vmem>>, %arg5: memref<1x5x64xbf16, #tpu.memory_space<vmem>>) attributes {dimension_semantics = [#tpu.dimension_semantics<parallel>], iteration_bounds = array<i64: 2>, scalar_prefetch = 0 : i64, scratch_operands = 0 : i64, tpu.core_type = #tpu.core_type<tc>, window_params = [{transform_indices = @transform_0, window_bounds = array<i64: 1, 5, 192>}, {pipeline_mode = #tpu.pipeline_mode<synchronous>, transform_indices = @transform_1, window_bounds = array<i64: 64, 64>}, {pipeline_mode = #tpu.pipeline_mode<synchronous>, transform_indices = @transform_2, window_bounds = array<i64: 1, 64>}, {transform_indices = @transform_3, window_bounds = array<i64: 1, 5, 64>}, {transform_indices = @transform_4, window_bounds = array<i64: 1, 5, 64>}]} {
    %c0 = arith.constant 0 : index
    %c0_0 = arith.constant 0 : index
    %c0_1 = arith.constant 0 : index
    %0 = vector.load %arg1[%c0, %c0_0, %c0_1] : memref<1x5x192xbf16, #tpu.memory_space<vmem>>, vector<1x5x192xbf16>
    %1 = vector.shape_cast %0 : vector<1x5x192xbf16> to vector<5x192xbf16>
    %2 = vector.extract_strided_slice %1 {offsets = [0, 0], sizes = [5, 32], strides = [1, 1]} : vector<5x192xbf16> to vector<5x32xbf16>
    %3 = vector.extract_strided_slice %1 {offsets = [0, 32], sizes = [5, 32], strides = [1, 1]} : vector<5x192xbf16> to vector<5x32xbf16>
    %4 = vector.shape_cast %2 : vector<5x32xbf16> to vector<1x5x32xbf16>
    %5 = vector.shape_cast %3 : vector<5x32xbf16> to vector<1x5x32xbf16>
    %6 = tpu.concatenate %4, %5 in 0 : vector<1x5x32xbf16>, vector<1x5x32xbf16> -> vector<2x5x32xbf16>
    %7 = vector.extract_strided_slice %1 {offsets = [0, 64], sizes = [5, 32], strides = [1, 1]} : vector<5x192xbf16> to vector<5x32xbf16>
    %8 = vector.extract_strided_slice %1 {offsets = [0, 96], sizes = [5, 32], strides = [1, 1]} : vector<5x192xbf16> to vector<5x32xbf16>
    %9 = vector.shape_cast %7 : vector<5x32xbf16> to vector<1x5x32xbf16>
    %10 = vector.shape_cast %8 : vector<5x32xbf16> to vector<1x5x32xbf16>
    %11 = tpu.concatenate %9, %10 in 0 : vector<1x5x32xbf16>, vector<1x5x32xbf16> -> vector<2x5x32xbf16>
    %12 = vector.extract_strided_slice %1 {offsets = [0, 128], sizes = [5, 32], strides = [1, 1]} : vector<5x192xbf16> to vector<5x32xbf16>
    %13 = vector.extract_strided_slice %1 {offsets = [0, 160], sizes = [5, 32], strides = [1, 1]} : vector<5x192xbf16> to vector<5x32xbf16>
    %14 = vector.shape_cast %12 : vector<5x32xbf16> to vector<1x5x32xbf16>
    %15 = vector.shape_cast %13 : vector<5x32xbf16> to vector<1x5x32xbf16>
    %16 = tpu.concatenate %14, %15 in 0 : vector<1x5x32xbf16>, vector<1x5x32xbf16> -> vector<2x5x32xbf16>
    %cst = arith.constant dense<0.000000e+00> : vector<2x5x5xf32>
    %17 = tpu.matmul %6, %11, %cst {dimension_numbers = #tpu.dot_dimension_numbers<[2], [2], [1], [1], [0, 0, 0, 1, 1, 1], [0], [0]>} : vector<2x5x32xbf16>, vector<2x5x32xbf16>, vector<2x5x5xf32> -> vector<2x5x5xf32>
    %cst_2 = arith.constant dense<0xFF800000> : vector<2x5xf32>
    %18 = vector.multi_reduction <maximumf>, %17, %cst_2 [2] : vector<2x5x5xf32> to vector<2x5xf32>
    %19 = vector.shape_cast %18 : vector<2x5xf32> to vector<2x5x1xf32>
    %20 = vector.broadcast %19 : vector<2x5x1xf32> to vector<2x5x5xf32>
    %21 = arith.subf %17, %20 : vector<2x5x5xf32>
    %22 = math.exp %21 : vector<2x5x5xf32>
    %cst_3 = arith.constant dense<0.000000e+00> : vector<2x5xf32>
    %23 = vector.multi_reduction <add>, %22, %cst_3 [2] : vector<2x5x5xf32> to vector<2x5xf32>
    %24 = vector.shape_cast %23 : vector<2x5xf32> to vector<2x5x1xf32>
    %25 = arith.truncf %22 : vector<2x5x5xf32> to vector<2x5x5xbf16>
    %cst_4 = arith.constant dense<0.000000e+00> : vector<2x5x32xf32>
    %26 = tpu.matmul %25, %16, %cst_4 {dimension_numbers = #tpu.dot_dimension_numbers<[2], [1], [1], [2], [0, 0, 0, 1, 1, 2], [0], [0]>} : vector<2x5x5xbf16>, vector<2x5x32xbf16>, vector<2x5x32xf32> -> vector<2x5x32xf32>
    %27 = tpu.reciprocal %24 {approx = true} : vector<2x5x1xf32> -> vector<2x5x1xf32>
    %28 = vector.broadcast %27 : vector<2x5x1xf32> to vector<2x5x32xf32>
    %29 = arith.mulf %26, %28 : vector<2x5x32xf32>
    %c0_5 = arith.constant 0 : index
    %c0_6 = arith.constant 0 : index
    %30 = vector.load %arg2[%c0_5, %c0_6] : memref<64x64xbf16, #tpu.memory_space<vmem>>, vector<32x64xbf16>
    %c32 = arith.constant 32 : index
    %c0_7 = arith.constant 0 : index
    %31 = vector.load %arg2[%c32, %c0_7] : memref<64x64xbf16, #tpu.memory_space<vmem>>, vector<32x64xbf16>
    %32 = vector.shape_cast %30 : vector<32x64xbf16> to vector<1x32x64xbf16>
    %33 = vector.shape_cast %31 : vector<32x64xbf16> to vector<1x32x64xbf16>
    %34 = tpu.concatenate %32, %33 in 0 : vector<1x32x64xbf16>, vector<1x32x64xbf16> -> vector<2x32x64xbf16>
    %35 = arith.truncf %29 : vector<2x5x32xf32> to vector<2x5x32xbf16>
    %cst_8 = arith.constant dense<0.000000e+00> : vector<2x5x64xf32>
    %36 = tpu.matmul %35, %34, %cst_8 {dimension_numbers = #tpu.dot_dimension_numbers<[2], [1], [1], [2], [0, 0, 0, 1, 1, 2], [0], [0]>} : vector<2x5x32xbf16>, vector<2x32x64xbf16>, vector<2x5x64xf32> -> vector<2x5x64xf32>
    %cst_9 = arith.constant dense<0.000000e+00> : vector<5x64xf32>
    %37 = vector.multi_reduction <add>, %36, %cst_9 [0] : vector<2x5x64xf32> to vector<5x64xf32>
    %c0_10 = arith.constant 0 : index
    %c0_11 = arith.constant 0 : index
    %38 = vector.load %arg3[%c0_10, %c0_11] : memref<1x64xf32, #tpu.memory_space<vmem>>, vector<1x64xf32>
    %39 = vector.broadcast %38 : vector<1x64xf32> to vector<5x64xf32>
    %40 = arith.addf %37, %39 : vector<5x64xf32>
    %c0_12 = arith.constant 0 : index
    %c0_13 = arith.constant 0 : index
    %c0_14 = arith.constant 0 : index
    %41 = vector.load %arg4[%c0_12, %c0_13, %c0_14] : memref<1x5x64xbf16, #tpu.memory_space<vmem>>, vector<1x5x64xbf16>
    %42 = vector.shape_cast %41 : vector<1x5x64xbf16> to vector<5x64xbf16>
    %43 = arith.extf %42 : vector<5x64xbf16> to vector<5x64xf32>
    %44 = arith.addf %40, %43 : vector<5x64xf32>
    %45 = arith.truncf %44 : vector<5x64xf32> to vector<5x64xbf16>
    %c0_15 = arith.constant 0 : index
    %c0_16 = arith.constant 0 : index
    %c0_17 = arith.constant 0 : index
    %46 = vector.load %arg5[%c0_15, %c0_16, %c0_17] : memref<1x5x64xbf16, #tpu.memory_space<vmem>>, vector<1x5x64xbf16>
    %47 = vector.shape_cast %46 : vector<1x5x64xbf16> to vector<5x64xbf16>
    %48 = vector.shape_cast %45 : vector<5x64xbf16> to vector<1x5x64xbf16>
    tpu.vector_store %arg5[%c0_15, %c0_16, %c0_17], %48 {strides = array<i32>} : memref<1x5x64xbf16, #tpu.memory_space<vmem>>, vector<1x5x64xbf16>,
    return
  }
  func.func @transform_0(%arg0: i32) -> (i32, i32, i32) {
    %c0_i32 = arith.constant 0 : i32
    %c0_i32_0 = arith.constant 0 : i32
    %c0_i32_1 = arith.constant 0 : i32
    return %arg0, %c0_i32, %c0_i32_0 : i32, i32, i32
  }
  func.func @transform_1(%arg0: i32) -> (i32, i32) {
    %c0_i32 = arith.constant 0 : i32
    %c0_i32_0 = arith.constant 0 : i32
    %c0_i32_1 = arith.constant 0 : i32
    return %c0_i32, %c0_i32_0 : i32, i32
  }
  func.func @transform_2(%arg0: i32) -> (i32, i32) {
    %c0_i32 = arith.constant 0 : i32
    %c0_i32_0 = arith.constant 0 : i32
    %c0_i32_1 = arith.constant 0 : i32
    return %c0_i32, %c0_i32_0 : i32, i32
  }
  func.func @transform_3(%arg0: i32) -> (i32, i32, i32) {
    %c0_i32 = arith.constant 0 : i32
    %c0_i32_0 = arith.constant 0 : i32
    %c0_i32_1 = arith.constant 0 : i32
    return %arg0, %c0_i32, %c0_i32_0 : i32, i32, i32
  }
  func.func @transform_4(%arg0: i32) -> (i32, i32, i32) {
    %c0_i32 = arith.constant 0 : i32
    %c0_i32_0 = arith.constant 0 : i32
    %c0_i32_1 = arith.constant 0 : i32
    return %arg0, %c0_i32, %c0_i32_0 : i32, i32, i32
  }
}

module attributes {stable_mosaic.version = 11 : i64} {
  func.func @_fused_matmul_kernel(%arg0: i32, %arg1: i32, %arg2: memref<16x64xbf16, #tpu.memory_space<vmem>>, %arg3: memref<64x192xbf16, #tpu.memory_space<vmem>>, %arg4: memref<1x64xf32, #tpu.memory_space<vmem>>, %arg5: memref<1x64xf32, #tpu.memory_space<vmem>>, %arg6: memref<1x192xf32, #tpu.memory_space<vmem>>, %arg7: memref<16x192xbf16, #tpu.memory_space<vmem>>) attributes {dimension_semantics = [#tpu.dimension_semantics<parallel>, #tpu.dimension_semantics<parallel>], iteration_bounds = array<i64: 1, 1>, scalar_prefetch = 0 : i64, scratch_operands = 0 : i64, tpu.core_type = #tpu.core_type<tc>, window_params = [{transform_indices = @transform_0, window_bounds = array<i64: 16, 64>}, {transform_indices = @transform_1, window_bounds = array<i64: 64, 192>}, {pipeline_mode = #tpu.pipeline_mode<synchronous>, transform_indices = @transform_2, window_bounds = array<i64: 1, 64>}, {pipeline_mode = #tpu.pipeline_mode<synchronous>, transform_indices = @transform_3, window_bounds = array<i64: 1, 64>}, {transform_indices = @transform_4, window_bounds = array<i64: 1, 192>}, {transform_indices = @transform_5, window_bounds = array<i64: 16, 192>}]} {
    %c0 = arith.constant 0 : index
    %c0_0 = arith.constant 0 : index
    %0 = vector.load %arg2[%c0, %c0_0] : memref<16x64xbf16, #tpu.memory_space<vmem>>, vector<16x64xbf16>
    %1 = arith.extf %0 : vector<16x64xbf16> to vector<16x64xf32>
    %cst = arith.constant dense<0.000000e+00> : vector<16xf32>
    %2 = vector.multi_reduction <add>, %1, %cst [1] : vector<16x64xf32> to vector<16xf32>
    %3 = vector.shape_cast %2 : vector<16xf32> to vector<16x1xf32>
    %cst_1 = arith.constant 6.400000e+01 : f32
    %4 = vector.broadcast %cst_1 : f32 to vector<16x1xf32>
    %5 = arith.divf %3, %4 : vector<16x1xf32>
    %6 = vector.broadcast %5 : vector<16x1xf32> to vector<16x64xf32>
    %7 = arith.subf %1, %6 : vector<16x64xf32>
    %8 = arith.mulf %7, %7 : vector<16x64xf32>
    %cst_2 = arith.constant dense<0.000000e+00> : vector<16xf32>
    %9 = vector.multi_reduction <add>, %8, %cst_2 [1] : vector<16x64xf32> to vector<16xf32>
    %10 = vector.shape_cast %9 : vector<16xf32> to vector<16x1xf32>
    %cst_3 = arith.constant 6.400000e+01 : f32
    %11 = vector.broadcast %cst_3 : f32 to vector<16x1xf32>
    %12 = arith.divf %10, %11 : vector<16x1xf32>
    %13 = vector.broadcast %5 : vector<16x1xf32> to vector<16x64xf32>
    %14 = arith.subf %1, %13 : vector<16x64xf32>
    %cst_4 = arith.constant 9.99999974E-6 : f32
    %15 = vector.broadcast %cst_4 : f32 to vector<16x1xf32>
    %16 = arith.addf %12, %15 : vector<16x1xf32>
    %17 = math.rsqrt %16 : vector<16x1xf32>
    %18 = vector.broadcast %17 : vector<16x1xf32> to vector<16x64xf32>
    %19 = arith.mulf %14, %18 : vector<16x64xf32>
    %c0_5 = arith.constant 0 : index
    %c0_6 = arith.constant 0 : index
    %20 = vector.load %arg4[%c0_5, %c0_6] : memref<1x64xf32, #tpu.memory_space<vmem>>, vector<1x64xf32>
    %21 = vector.broadcast %20 : vector<1x64xf32> to vector<16x64xf32>
    %22 = arith.mulf %19, %21 : vector<16x64xf32>
    %c0_7 = arith.constant 0 : index
    %c0_8 = arith.constant 0 : index
    %23 = vector.load %arg5[%c0_7, %c0_8] : memref<1x64xf32, #tpu.memory_space<vmem>>, vector<1x64xf32>
    %24 = vector.broadcast %23 : vector<1x64xf32> to vector<16x64xf32>
    %25 = arith.addf %22, %24 : vector<16x64xf32>
    %26 = arith.truncf %25 : vector<16x64xf32> to vector<16x64xbf16>
    %c0_9 = arith.constant 0 : index
    %c0_10 = arith.constant 0 : index
    %27 = vector.load %arg3[%c0_9, %c0_10] : memref<64x192xbf16, #tpu.memory_space<vmem>>, vector<64x192xbf16>
    %cst_11 = arith.constant dense<0.000000e+00> : vector<16x192xf32>
    %28 = tpu.matmul %26, %27, %cst_11 {dimension_numbers = #tpu.dot_dimension_numbers<[1], [0], [0], [1], [0, 0, 1, 1], [], []>} : vector<16x64xbf16>, vector<64x192xbf16>, vector<16x192xf32> -> vector<16x192xf32>
    %c0_12 = arith.constant 0 : index
    %c0_13 = arith.constant 0 : index
    %29 = vector.load %arg6[%c0_12, %c0_13] : memref<1x192xf32, #tpu.memory_space<vmem>>, vector<1x192xf32>
    %30 = vector.broadcast %29 : vector<1x192xf32> to vector<16x192xf32>
    %31 = arith.addf %28, %30 : vector<16x192xf32>
    %32 = arith.truncf %31 : vector<16x192xf32> to vector<16x192xbf16>
    %c0_14 = arith.constant 0 : index
    %c0_15 = arith.constant 0 : index
    %33 = vector.load %arg7[%c0_14, %c0_15] : memref<16x192xbf16, #tpu.memory_space<vmem>>, vector<16x192xbf16>
    tpu.vector_store %arg7[%c0_14, %c0_15], %32 {strides = array<i32>} : memref<16x192xbf16, #tpu.memory_space<vmem>>, vector<16x192xbf16>,
    return
  }
  func.func @transform_0(%arg0: i32, %arg1: i32) -> (i32, i32) {
    %c0_i32 = arith.constant 0 : i32
    %c0_i32_0 = arith.constant 0 : i32
    return %arg1, %c0_i32 : i32, i32
  }
  func.func @transform_1(%arg0: i32, %arg1: i32) -> (i32, i32) {
    %c0_i32 = arith.constant 0 : i32
    %c0_i32_0 = arith.constant 0 : i32
    return %c0_i32, %arg0 : i32, i32
  }
  func.func @transform_2(%arg0: i32, %arg1: i32) -> (i32, i32) {
    %c0_i32 = arith.constant 0 : i32
    %c0_i32_0 = arith.constant 0 : i32
    %c0_i32_1 = arith.constant 0 : i32
    return %c0_i32, %c0_i32_0 : i32, i32
  }
  func.func @transform_3(%arg0: i32, %arg1: i32) -> (i32, i32) {
    %c0_i32 = arith.constant 0 : i32
    %c0_i32_0 = arith.constant 0 : i32
    %c0_i32_1 = arith.constant 0 : i32
    return %c0_i32, %c0_i32_0 : i32, i32
  }
  func.func @transform_4(%arg0: i32, %arg1: i32) -> (i32, i32) {
    %c0_i32 = arith.constant 0 : i32
    %c0_i32_0 = arith.constant 0 : i32
    return %c0_i32, %arg0 : i32, i32
  }
  func.func @transform_5(%arg0: i32, %arg1: i32) -> (i32, i32) {
    %c0_i32 = arith.constant 0 : i32
    return %arg1, %arg0 : i32, i32
  }
}

module attributes {stable_mosaic.version = 11 : i64} {
  func.func @_fused_matmul_kernel(%arg0: i32, %arg1: i32, %arg2: memref<16x64xbf16, #tpu.memory_space<vmem>>, %arg3: memref<64x256xbf16, #tpu.memory_space<vmem>>, %arg4: memref<1x64xf32, #tpu.memory_space<vmem>>, %arg5: memref<1x64xf32, #tpu.memory_space<vmem>>, %arg6: memref<1x256xf32, #tpu.memory_space<vmem>>, %arg7: memref<16x256xbf16, #tpu.memory_space<vmem>>) attributes {dimension_semantics = [#tpu.dimension_semantics<parallel>, #tpu.dimension_semantics<parallel>], iteration_bounds = array<i64: 1, 1>, scalar_prefetch = 0 : i64, scratch_operands = 0 : i64, tpu.core_type = #tpu.core_type<tc>, window_params = [{transform_indices = @transform_0, window_bounds = array<i64: 16, 64>}, {transform_indices = @transform_1, window_bounds = array<i64: 64, 256>}, {pipeline_mode = #tpu.pipeline_mode<synchronous>, transform_indices = @transform_2, window_bounds = array<i64: 1, 64>}, {pipeline_mode = #tpu.pipeline_mode<synchronous>, transform_indices = @transform_3, window_bounds = array<i64: 1, 64>}, {transform_indices = @transform_4, window_bounds = array<i64: 1, 256>}, {transform_indices = @transform_5, window_bounds = array<i64: 16, 256>}]} {
    %c0 = arith.constant 0 : index
    %c0_0 = arith.constant 0 : index
    %0 = vector.load %arg2[%c0, %c0_0] : memref<16x64xbf16, #tpu.memory_space<vmem>>, vector<16x64xbf16>
    %1 = arith.extf %0 : vector<16x64xbf16> to vector<16x64xf32>
    %cst = arith.constant dense<0.000000e+00> : vector<16xf32>
    %2 = vector.multi_reduction <add>, %1, %cst [1] : vector<16x64xf32> to vector<16xf32>
    %3 = vector.shape_cast %2 : vector<16xf32> to vector<16x1xf32>
    %cst_1 = arith.constant 6.400000e+01 : f32
    %4 = vector.broadcast %cst_1 : f32 to vector<16x1xf32>
    %5 = arith.divf %3, %4 : vector<16x1xf32>
    %6 = vector.broadcast %5 : vector<16x1xf32> to vector<16x64xf32>
    %7 = arith.subf %1, %6 : vector<16x64xf32>
    %8 = arith.mulf %7, %7 : vector<16x64xf32>
    %cst_2 = arith.constant dense<0.000000e+00> : vector<16xf32>
    %9 = vector.multi_reduction <add>, %8, %cst_2 [1] : vector<16x64xf32> to vector<16xf32>
    %10 = vector.shape_cast %9 : vector<16xf32> to vector<16x1xf32>
    %cst_3 = arith.constant 6.400000e+01 : f32
    %11 = vector.broadcast %cst_3 : f32 to vector<16x1xf32>
    %12 = arith.divf %10, %11 : vector<16x1xf32>
    %13 = vector.broadcast %5 : vector<16x1xf32> to vector<16x64xf32>
    %14 = arith.subf %1, %13 : vector<16x64xf32>
    %cst_4 = arith.constant 9.99999974E-6 : f32
    %15 = vector.broadcast %cst_4 : f32 to vector<16x1xf32>
    %16 = arith.addf %12, %15 : vector<16x1xf32>
    %17 = math.rsqrt %16 : vector<16x1xf32>
    %18 = vector.broadcast %17 : vector<16x1xf32> to vector<16x64xf32>
    %19 = arith.mulf %14, %18 : vector<16x64xf32>
    %c0_5 = arith.constant 0 : index
    %c0_6 = arith.constant 0 : index
    %20 = vector.load %arg4[%c0_5, %c0_6] : memref<1x64xf32, #tpu.memory_space<vmem>>, vector<1x64xf32>
    %21 = vector.broadcast %20 : vector<1x64xf32> to vector<16x64xf32>
    %22 = arith.mulf %19, %21 : vector<16x64xf32>
    %c0_7 = arith.constant 0 : index
    %c0_8 = arith.constant 0 : index
    %23 = vector.load %arg5[%c0_7, %c0_8] : memref<1x64xf32, #tpu.memory_space<vmem>>, vector<1x64xf32>
    %24 = vector.broadcast %23 : vector<1x64xf32> to vector<16x64xf32>
    %25 = arith.addf %22, %24 : vector<16x64xf32>
    %26 = arith.truncf %25 : vector<16x64xf32> to vector<16x64xbf16>
    %c0_9 = arith.constant 0 : index
    %c0_10 = arith.constant 0 : index
    %27 = vector.load %arg3[%c0_9, %c0_10] : memref<64x256xbf16, #tpu.memory_space<vmem>>, vector<64x256xbf16>
    %cst_11 = arith.constant dense<0.000000e+00> : vector<16x256xf32>
    %28 = tpu.matmul %26, %27, %cst_11 {dimension_numbers = #tpu.dot_dimension_numbers<[1], [0], [0], [1], [0, 0, 1, 1], [], []>} : vector<16x64xbf16>, vector<64x256xbf16>, vector<16x256xf32> -> vector<16x256xf32>
    %c0_12 = arith.constant 0 : index
    %c0_13 = arith.constant 0 : index
    %29 = vector.load %arg6[%c0_12, %c0_13] : memref<1x256xf32, #tpu.memory_space<vmem>>, vector<1x256xf32>
    %30 = vector.broadcast %29 : vector<1x256xf32> to vector<16x256xf32>
    %31 = arith.addf %28, %30 : vector<16x256xf32>
    %cst_14 = arith.constant 1.702000e+00 : f32
    %32 = vector.broadcast %cst_14 : f32 to vector<16x256xf32>
    %33 = arith.mulf %32, %31 : vector<16x256xf32>
    %34 = arith.negf %33 : vector<16x256xf32>
    %35 = math.exp %34 : vector<16x256xf32>
    %cst_15 = arith.constant 1.000000e+00 : f32
    %36 = vector.broadcast %cst_15 : f32 to vector<16x256xf32>
    %37 = arith.addf %36, %35 : vector<16x256xf32>
    %38 = arith.divf %36, %37 : vector<16x256xf32>
    %39 = arith.mulf %31, %38 : vector<16x256xf32>
    %40 = arith.truncf %39 : vector<16x256xf32> to vector<16x256xbf16>
    %c0_16 = arith.constant 0 : index
    %c0_17 = arith.constant 0 : index
    %41 = vector.load %arg7[%c0_16, %c0_17] : memref<16x256xbf16, #tpu.memory_space<vmem>>, vector<16x256xbf16>
    tpu.vector_store %arg7[%c0_16, %c0_17], %40 {strides = array<i32>} : memref<16x256xbf16, #tpu.memory_space<vmem>>, vector<16x256xbf16>,
    return
  }
  func.func @transform_0(%arg0: i32, %arg1: i32) -> (i32, i32) {
    %c0_i32 = arith.constant 0 : i32
    %c0_i32_0 = arith.constant 0 : i32
    return %arg1, %c0_i32 : i32, i32
  }
  func.func @transform_1(%arg0: i32, %arg1: i32) -> (i32, i32) {
    %c0_i32 = arith.constant 0 : i32
    %c0_i32_0 = arith.constant 0 : i32
    return %c0_i32, %arg0 : i32, i32
  }
  func.func @transform_2(%arg0: i32, %arg1: i32) -> (i32, i32) {
    %c0_i32 = arith.constant 0 : i32
    %c0_i32_0 = arith.constant 0 : i32
    %c0_i32_1 = arith.constant 0 : i32
    return %c0_i32, %c0_i32_0 : i32, i32
  }
  func.func @transform_3(%arg0: i32, %arg1: i32) -> (i32, i32) {
    %c0_i32 = arith.constant 0 : i32
    %c0_i32_0 = arith.constant 0 : i32
    %c0_i32_1 = arith.constant 0 : i32
    return %c0_i32, %c0_i32_0 : i32, i32
  }
  func.func @transform_4(%arg0: i32, %arg1: i32) -> (i32, i32) {
    %c0_i32 = arith.constant 0 : i32
    %c0_i32_0 = arith.constant 0 : i32
    return %c0_i32, %arg0 : i32, i32
  }
  func.func @transform_5(%arg0: i32, %arg1: i32) -> (i32, i32) {
    %c0_i32 = arith.constant 0 : i32
    return %arg1, %arg0 : i32, i32
  }
}

module attributes {stable_mosaic.version = 11 : i64} {
  func.func @_fused_matmul_kernel(%arg0: i32, %arg1: i32, %arg2: memref<16x256xbf16, #tpu.memory_space<vmem>>, %arg3: memref<256x64xbf16, #tpu.memory_space<vmem>>, %arg4: memref<1x64xf32, #tpu.memory_space<vmem>>, %arg5: memref<16x64xbf16, #tpu.memory_space<vmem>>, %arg6: memref<16x64xbf16, #tpu.memory_space<vmem>>) attributes {dimension_semantics = [#tpu.dimension_semantics<parallel>, #tpu.dimension_semantics<parallel>], iteration_bounds = array<i64: 1, 1>, scalar_prefetch = 0 : i64, scratch_operands = 0 : i64, tpu.core_type = #tpu.core_type<tc>, window_params = [{transform_indices = @transform_0, window_bounds = array<i64: 16, 256>}, {transform_indices = @transform_1, window_bounds = array<i64: 256, 64>}, {transform_indices = @transform_2, window_bounds = array<i64: 1, 64>}, {transform_indices = @transform_3, window_bounds = array<i64: 16, 64>}, {transform_indices = @transform_4, window_bounds = array<i64: 16, 64>}]} {
    %c0 = arith.constant 0 : index
    %c0_0 = arith.constant 0 : index
    %0 = vector.load %arg2[%c0, %c0_0] : memref<16x256xbf16, #tpu.memory_space<vmem>>, vector<16x256xbf16>
    %c0_1 = arith.constant 0 : index
    %c0_2 = arith.constant 0 : index
    %1 = vector.load %arg3[%c0_1, %c0_2] : memref<256x64xbf16, #tpu.memory_space<vmem>>, vector<256x64xbf16>
    %cst = arith.constant dense<0.000000e+00> : vector<16x64xf32>
    %2 = tpu.matmul %0, %1, %cst {dimension_numbers = #tpu.dot_dimension_numbers<[1], [0], [0], [1], [0, 0, 1, 1], [], []>} : vector<16x256xbf16>, vector<256x64xbf16>, vector<16x64xf32> -> vector<16x64xf32>
    %c0_3 = arith.constant 0 : index
    %c0_4 = arith.constant 0 : index
    %3 = vector.load %arg4[%c0_3, %c0_4] : memref<1x64xf32, #tpu.memory_space<vmem>>, vector<1x64xf32>
    %4 = vector.broadcast %3 : vector<1x64xf32> to vector<16x64xf32>
    %5 = arith.addf %2, %4 : vector<16x64xf32>
    %c0_5 = arith.constant 0 : index
    %c0_6 = arith.constant 0 : index
    %6 = vector.load %arg5[%c0_5, %c0_6] : memref<16x64xbf16, #tpu.memory_space<vmem>>, vector<16x64xbf16>
    %7 = arith.extf %6 : vector<16x64xbf16> to vector<16x64xf32>
    %8 = arith.addf %5, %7 : vector<16x64xf32>
    %9 = arith.truncf %8 : vector<16x64xf32> to vector<16x64xbf16>
    %c0_7 = arith.constant 0 : index
    %c0_8 = arith.constant 0 : index
    %10 = vector.load %arg6[%c0_7, %c0_8] : memref<16x64xbf16, #tpu.memory_space<vmem>>, vector<16x64xbf16>
    tpu.vector_store %arg6[%c0_7, %c0_8], %9 {strides = array<i32>} : memref<16x64xbf16, #tpu.memory_space<vmem>>, vector<16x64xbf16>,
    return
  }
  func.func @transform_0(%arg0: i32, %arg1: i32) -> (i32, i32) {
    %c0_i32 = arith.constant 0 : i32
    %c0_i32_0 = arith.constant 0 : i32
    return %arg1, %c0_i32 : i32, i32
  }
  func.func @transform_1(%arg0: i32, %arg1: i32) -> (i32, i32) {
    %c0_i32 = arith.constant 0 : i32
    %c0_i32_0 = arith.constant 0 : i32
    return %c0_i32, %arg0 : i32, i32
  }
  func.func @transform_2(%arg0: i32, %arg1: i32) -> (i32, i32) {
    %c0_i32 = arith.constant 0 : i32
    %c0_i32_0 = arith.constant 0 : i32
    return %c0_i32, %arg0 : i32, i32
  }
  func.func @transform_3(%arg0: i32, %arg1: i32) -> (i32, i32) {
    %c0_i32 = arith.constant 0 : i32
    return %arg1, %arg0 : i32, i32
  }
  func.func @transform_4(%arg0: i32, %arg1: i32) -> (i32, i32) {
    %c0_i32 = arith.constant 0 : i32
    return %arg1, %arg0 : i32, i32
  }
}

module attributes {stable_mosaic.version = 11 : i64} {
  func.func @_fused_matmul_kernel(%arg0: i32, %arg1: i32, %arg2: memref<8x64xbf16, #tpu.memory_space<vmem>>, %arg3: memref<64x32xbf16, #tpu.memory_space<vmem>>, %arg4: memref<1x64xf32, #tpu.memory_space<vmem>>, %arg5: memref<1x64xf32, #tpu.memory_space<vmem>>, %arg6: memref<8x32xf32, #tpu.memory_space<vmem>>) attributes {dimension_semantics = [#tpu.dimension_semantics<parallel>, #tpu.dimension_semantics<parallel>], iteration_bounds = array<i64: 1, 1>, scalar_prefetch = 0 : i64, scratch_operands = 0 : i64, tpu.core_type = #tpu.core_type<tc>, window_params = [{transform_indices = @transform_0, window_bounds = array<i64: 8, 64>}, {transform_indices = @transform_1, window_bounds = array<i64: 64, 32>}, {pipeline_mode = #tpu.pipeline_mode<synchronous>, transform_indices = @transform_2, window_bounds = array<i64: 1, 64>}, {pipeline_mode = #tpu.pipeline_mode<synchronous>, transform_indices = @transform_3, window_bounds = array<i64: 1, 64>}, {transform_indices = @transform_4, window_bounds = array<i64: 8, 32>}]} {
    %c0 = arith.constant 0 : index
    %c0_0 = arith.constant 0 : index
    %0 = vector.load %arg2[%c0, %c0_0] : memref<8x64xbf16, #tpu.memory_space<vmem>>, vector<8x64xbf16>
    %1 = arith.extf %0 : vector<8x64xbf16> to vector<8x64xf32>
    %cst = arith.constant dense<0.000000e+00> : vector<8xf32>
    %2 = vector.multi_reduction <add>, %1, %cst [1] : vector<8x64xf32> to vector<8xf32>
    %3 = vector.shape_cast %2 : vector<8xf32> to vector<8x1xf32>
    %cst_1 = arith.constant 6.400000e+01 : f32
    %4 = vector.broadcast %cst_1 : f32 to vector<8x1xf32>
    %5 = arith.divf %3, %4 : vector<8x1xf32>
    %6 = vector.broadcast %5 : vector<8x1xf32> to vector<8x64xf32>
    %7 = arith.subf %1, %6 : vector<8x64xf32>
    %8 = arith.mulf %7, %7 : vector<8x64xf32>
    %cst_2 = arith.constant dense<0.000000e+00> : vector<8xf32>
    %9 = vector.multi_reduction <add>, %8, %cst_2 [1] : vector<8x64xf32> to vector<8xf32>
    %10 = vector.shape_cast %9 : vector<8xf32> to vector<8x1xf32>
    %cst_3 = arith.constant 6.400000e+01 : f32
    %11 = vector.broadcast %cst_3 : f32 to vector<8x1xf32>
    %12 = arith.divf %10, %11 : vector<8x1xf32>
    %13 = vector.broadcast %5 : vector<8x1xf32> to vector<8x64xf32>
    %14 = arith.subf %1, %13 : vector<8x64xf32>
    %cst_4 = arith.constant 9.99999974E-6 : f32
    %15 = vector.broadcast %cst_4 : f32 to vector<8x1xf32>
    %16 = arith.addf %12, %15 : vector<8x1xf32>
    %17 = math.rsqrt %16 : vector<8x1xf32>
    %18 = vector.broadcast %17 : vector<8x1xf32> to vector<8x64xf32>
    %19 = arith.mulf %14, %18 : vector<8x64xf32>
    %c0_5 = arith.constant 0 : index
    %c0_6 = arith.constant 0 : index
    %20 = vector.load %arg4[%c0_5, %c0_6] : memref<1x64xf32, #tpu.memory_space<vmem>>, vector<1x64xf32>
    %21 = vector.broadcast %20 : vector<1x64xf32> to vector<8x64xf32>
    %22 = arith.mulf %19, %21 : vector<8x64xf32>
    %c0_7 = arith.constant 0 : index
    %c0_8 = arith.constant 0 : index
    %23 = vector.load %arg5[%c0_7, %c0_8] : memref<1x64xf32, #tpu.memory_space<vmem>>, vector<1x64xf32>
    %24 = vector.broadcast %23 : vector<1x64xf32> to vector<8x64xf32>
    %25 = arith.addf %22, %24 : vector<8x64xf32>
    %26 = arith.truncf %25 : vector<8x64xf32> to vector<8x64xbf16>
    %c0_9 = arith.constant 0 : index
    %c0_10 = arith.constant 0 : index
    %27 = vector.load %arg3[%c0_9, %c0_10] : memref<64x32xbf16, #tpu.memory_space<vmem>>, vector<64x32xbf16>
    %cst_11 = arith.constant dense<0.000000e+00> : vector<8x32xf32>
    %28 = tpu.matmul %26, %27, %cst_11 {dimension_numbers = #tpu.dot_dimension_numbers<[1], [0], [0], [1], [0, 0, 1, 1], [], []>} : vector<8x64xbf16>, vector<64x32xbf16>, vector<8x32xf32> -> vector<8x32xf32>
    %c0_12 = arith.constant 0 : index
    %c0_13 = arith.constant 0 : index
    %29 = vector.load %arg6[%c0_12, %c0_13] : memref<8x32xf32, #tpu.memory_space<vmem>>, vector<8x32xf32>
    tpu.vector_store %arg6[%c0_12, %c0_13], %28 {strides = array<i32>} : memref<8x32xf32, #tpu.memory_space<vmem>>, vector<8x32xf32>,
    return
  }
  func.func @transform_0(%arg0: i32, %arg1: i32) -> (i32, i32) {
    %c0_i32 = arith.constant 0 : i32
    %c0_i32_0 = arith.constant 0 : i32
    return %arg1, %c0_i32 : i32, i32
  }
  func.func @transform_1(%arg0: i32, %arg1: i32) -> (i32, i32) {
    %c0_i32 = arith.constant 0 : i32
    %c0_i32_0 = arith.constant 0 : i32
    return %c0_i32, %arg0 : i32, i32
  }
  func.func @transform_2(%arg0: i32, %arg1: i32) -> (i32, i32) {
    %c0_i32 = arith.constant 0 : i32
    %c0_i32_0 = arith.constant 0 : i32
    %c0_i32_1 = arith.constant 0 : i32
    return %c0_i32, %c0_i32_0 : i32, i32
  }
  func.func @transform_3(%arg0: i32, %arg1: i32) -> (i32, i32) {
    %c0_i32 = arith.constant 0 : i32
    %c0_i32_0 = arith.constant 0 : i32
    %c0_i32_1 = arith.constant 0 : i32
    return %c0_i32, %c0_i32_0 : i32, i32
  }
  func.func @transform_4(%arg0: i32, %arg1: i32) -> (i32, i32) {
    %c0_i32 = arith.constant 0 : i32
    return %arg1, %arg0 : i32, i32
  }
}

</mosaic_0001>

<llo_original>
// kernel: encode_image.12
$region0: #{encode_image.12}
  #allocation0 [shape = 'u32[]', space=smem, size = 0x4, offset = 0x4, fixed_abs, tag = 'smem constant byte address 0x4 - core index']
  #allocation1 [shape = 'u32[144,128]{1,0:T(1,128)}', space=vmem, size = 0x12000, scoped, tag = 'internal scratch']
  %s0 = inlined_call_operand.vmem [shape: bf16[2,5,64], index: 0, kind: input, shape index: {}]
  %s1 = inlined_call_operand.vmem [shape: f32[5,64], index: 1, kind: input, shape index: {}]
  %s2 = inlined_call_operand.vmem [shape: f32[1,64], index: 2, kind: input, shape index: {}]
  %s3 = inlined_call_operand.vmem [shape: f32[1,64], index: 3, kind: input, shape index: {}]
  %s4 = inlined_call_operand.vmem [shape: bf16[2,5,64], index: 4, kind: output, shape index: {}]
  %s5 = sld [smem:[#allocation0]]
  $region49: #{encode_image.12} parent=0
    _
  %s7 = ssub.s32 1, %s5
  %s8 = scalar_select 0, %s7, %s5
  loop: start=0, step=1, limit=4
  $region2: #{encode_image.12} parent=0 // loop_pre_header
    _
  $region3: #{encode_image.12} parent=0 // loop_header
    %s10 = sphi 0, %s14
    %p11 = scmp.ge.s32.totalorder %s10, 4
    %s20 = sphi 0, %s22
    %s23 = sphi 0, %s20
    %s24 = sphi 0, %s23
    %s40 = sphi 0, %s24
    %s44 = sphi 0, %s44
    %s46 = sphi 0, %s44
    %s47 = sphi 0, %s46
    %s61 = sphi 0, %s47
    %s65 = sphi 0, %s65
    %s67 = sphi 0, %s65
    %s68 = sphi 0, %s67
    %s82 = sphi 0, %s68
    %s86 = sphi 0, %s86
    %s88 = sphi 0, %s86
    %s89 = sphi 0, %s88
    %s103 = sphi 0, %s89
    %s109 = sphi 0, %s111
    %s112 = sphi 0, %s109
    %s113 = sphi 0, %s112
    %s129 = sphi 0, %s113
  $region4: #{encode_image.12} parent=0 // loop_header_branch
    %13 = sbr.rel (%p11) target = $region8
  $region5: #{encode_image.12} parent=0 // loop_body
    %s15 = ssub.s32 %s10, 1
    %s16 = ssub.s32 %s10, 2
    %s17 = sadd.s32 %s10, 1
    %s18 = ssub.s32 %s10, %s17
    %p19 = scmp.eq.s32.totalorder %s18, 0
    %s21 = sadd.s32 %s20, 1
    %s22 = scalar_select %p19, %s20, %s21
    %p25 = pneg %p19
    %p26 = scmp.eq.s32.totalorder %s10, 1
    %p27 = por %p25, %p26
    %p28 = scmp.ne.s32.totalorder %s20, %s23
    %p29 = scmp.eq.s32.totalorder %s10, 0
    %p30 = por %p28, %p29
    %p31 = scmp.ne.s32.totalorder %s20, %s23
    %p32 = scmp.eq.s32.totalorder %s15, 1
    %p33 = por %p31, %p32
    %p34 = scmp.ne.s32.totalorder %s23, %s24
    %p35 = scmp.eq.s32.totalorder %s15, 0
    %p36 = por %p34, %p35
    %p37 = scmp.ne.s32.totalorder %s23, %s24
    %p38 = scmp.eq.s32.totalorder %s16, 1
    %p39 = por %p37, %p38
    %p41 = scmp.ne.s32.totalorder %s24, %s40
    %p42 = scmp.eq.s32.totalorder %s16, 0
    %p43 = por %p41, %p42
    %s45 = sadd.s32 %s44, 1
    %p48 = scmp.eq.s32.totalorder %s10, 1
    %p49 = scmp.ne.s32.totalorder %s44, %s46
    %p50 = scmp.eq.s32.totalorder %s10, 0
    %p51 = por %p49, %p50
    %p52 = scmp.ne.s32.totalorder %s44, %s46
    %p53 = scmp.eq.s32.totalorder %s15, 1
    %p54 = por %p52, %p53
    %p55 = scmp.ne.s32.totalorder %s46, %s47
    %p56 = scmp.eq.s32.totalorder %s15, 0
    %p57 = por %p55, %p56
    %p58 = scmp.ne.s32.totalorder %s46, %s47
    %p59 = scmp.eq.s32.totalorder %s16, 1
    %p60 = por %p58, %p59
    %p62 = scmp.ne.s32.totalorder %s47, %s61
    %p63 = scmp.eq.s32.totalorder %s16, 0
    %p64 = por %p62, %p63
    %s66 = sadd.s32 %s65, 1
    %p69 = scmp.eq.s32.totalorder %s10, 1
    %p70 = scmp.ne.s32.totalorder %s65, %s67
    %p71 = scmp.eq.s32.totalorder %s10, 0
    %p72 = por %p70, %p71
    %p73 = scmp.ne.s32.totalorder %s65, %s67
    %p74 = scmp.eq.s32.totalorder %s15, 1
    %p75 = por %p73, %p74
    %p76 = scmp.ne.s32.totalorder %s67, %s68
    %p77 = scmp.eq.s32.totalorder %s15, 0
    %p78 = por %p76, %p77
    %p79 = scmp.ne.s32.totalorder %s67, %s68
    %p80 = scmp.eq.s32.totalorder %s16, 1
    %p81 = por %p79, %p80
    %p83 = scmp.ne.s32.totalorder %s68, %s82
    %p84 = scmp.eq.s32.totalorder %s16, 0
    %p85 = por %p83, %p84
    %s87 = sadd.s32 %s86, 1
    %p90 = scmp.eq.s32.totalorder %s10, 1
    %p91 = scmp.ne.s32.totalorder %s86, %s88
    %p92 = scmp.eq.s32.totalorder %s10, 0
    %p93 = por %p91, %p92
    %p94 = scmp.ne.s32.totalorder %s86, %s88
    %p95 = scmp.eq.s32.totalorder %s15, 1
    %p96 = por %p94, %p95
    %p97 = scmp.ne.s32.totalorder %s88, %s89
    %p98 = scmp.eq.s32.totalorder %s15, 0
    %p99 = por %p97, %p98
    %p100 = scmp.ne.s32.totalorder %s88, %s89
    %p101 = scmp.eq.s32.totalorder %s16, 1
    %p102 = por %p100, %p101
    %p104 = scmp.ne.s32.totalorder %s89, %s103
    %p105 = scmp.eq.s32.totalorder %s16, 0
    %p106 = por %p104, %p105
    %s107 = ssub.s32 %s10, %s17
    %p108 = scmp.eq.s32.totalorder %s107, 0
    %s110 = sadd.s32 %s109, 1
    %s111 = scalar_select %p108, %s109, %s110
    %p114 = pneg %p108
    %p115 = scmp.eq.s32.totalorder %s10, 1
    %p116 = por %p114, %p115
    %p117 = scmp.ne.s32.totalorder %s109, %s112
    %p118 = scmp.eq.s32.totalorder %s10, 0
    %p119 = por %p117, %p118
    %p120 = scmp.ne.s32.totalorder %s109, %s112
    %p121 = scmp.eq.s32.totalorder %s15, 1
    %p122 = por %p120, %p121
    %p123 = scmp.ne.s32.totalorder %s112, %s113
    %p124 = scmp.eq.s32.totalorder %s15, 0
    %p125 = por %p123, %p124
    %p126 = scmp.ne.s32.totalorder %s112, %s113
    %p127 = scmp.eq.s32.totalorder %s16, 1
    %p128 = por %p126, %p127
    %p130 = scmp.ne.s32.totalorder %s113, %s129
    %p131 = scmp.eq.s32.totalorder %s16, 0
    %p132 = por %p130, %p131
    %p133 = scmp.le.s32.totalorder 1, %s10
    %p134 = scmp.lt.s32.totalorder %s10, 3
    %p135 = pnand %p133, %p134
    %p136 = pneg %p135
    // Predicated region
    $region9: #{encode_image.12} parent=5 // pred_check
      _
    $region10: #{encode_image.12} parent=5 // pred_check_branch
      %138 = sbr.rel (%p135) target = $region12
    $region11: #{encode_image.12} parent=5 // pred_region
      %s139 = ssub.s32 %s10, 1
      // Predicated region
      $region13: #{encode_image.12} parent=11 // pred_check
        %p140 = pneg %p57
      $region14: #{encode_image.12} parent=11 // pred_check_branch
        %142 = sbr.rel (%p140) target = $region16
      $region15: #{encode_image.12} parent=11 // pred_region
        _
      $region16: #{encode_image.12} parent=11 // pred_fallthru
        _
      // Predicated region
      $region17: #{encode_image.12} parent=11 // pred_check
        %p143 = pneg %p78
      $region18: #{encode_image.12} parent=11 // pred_check_branch
        %145 = sbr.rel (%p143) target = $region20
      $region19: #{encode_image.12} parent=11 // pred_region
        _
      $region20: #{encode_image.12} parent=11 // pred_fallthru
        _
      // Predicated region
      $region21: #{encode_image.12} parent=11 // pred_check
        %p146 = pneg %p99
      $region22: #{encode_image.12} parent=11 // pred_check_branch
        %148 = sbr.rel (%p146) target = $region24
      $region23: #{encode_image.12} parent=11 // pred_region
        _
      $region24: #{encode_image.12} parent=11 // pred_fallthru
        _
    $region12: #{encode_image.12} parent=5 // pred_fallthru
      _
    %p149 = scmp.lt.s32.totalorder %s10, 2
    // Predicated region
    $region25: #{encode_image.12} parent=5 // pred_check
      %p150 = pneg %p149
    $region26: #{encode_image.12} parent=5 // pred_check_branch
      %152 = sbr.rel (%p150) target = $region28
    $region27: #{encode_image.12} parent=5 // pred_region
      // Predicated region
      $region29: #{encode_image.12} parent=27 // pred_check
        %p153 = pneg %p30
      $region30: #{encode_image.12} parent=27 // pred_check_branch
        %155 = sbr.rel (%p153) target = $region32
      $region31: #{encode_image.12} parent=27 // pred_region
        %p156 = scmp.lt.s32.totalorder %s10, 1
        %s157 = scalar_select %p156, %s10, 1
        %s158 = smul.addr %s157, 4
        %s159 = scalar_lea.vmem %s0, %s158
      $region32: #{encode_image.12} parent=27 // pred_fallthru
        _
    $region28: #{encode_image.12} parent=5 // pred_fallthru
      _
    %p160 = scmp.le.s32.totalorder 1, %s10
    %p161 = scmp.lt.s32.totalorder %s10, 3
    %p162 = pnand %p160, %p161
    %p163 = pneg %p162
    // Predicated region
    $region33: #{encode_image.12} parent=5 // pred_check
      _
    $region34: #{encode_image.12} parent=5 // pred_check_branch
      %165 = sbr.rel (%p162) target = $region36
    $region35: #{encode_image.12} parent=5 // pred_region
      %s166 = ssub.s32 %s10, 1
      %p167 = scmp.lt.s32.totalorder %s15, 1
      %s168 = scalar_select %p167, %s15, 1
      %s169 = smul.addr %s168, 4
      %s170 = scalar_lea.vmem %s0, %s169
      %p171 = pneg %p36
      %p172 = pneg %p33
      %p173 = pneg %p57
      %p174 = pneg %p54
      %p175 = pneg %p78
      %p176 = pneg %p75
      %p177 = pneg %p99
      %p178 = pneg %p96
      %p179 = pneg %p125
      %p180 = pneg %p122
      %p181 = scmp.lt.s32.totalorder %s15, 1
      %s182 = scalar_select %p181, %s15, 1
      %s183 = smul.addr %s182, 4
      %s184 = scalar_lea.vmem %s4, %s183
      %p185 = scmp.lt.s32.totalorder %s15, 1
      %s186 = scalar_select %p185, %s15, 1
      %s187 = smul.addr %s186, 4
      %s188 = scalar_lea.vmem %s0, %s187
      %p189 = scmp.lt.s32.totalorder %s15, 1
      %s190 = scalar_select %p189, %s15, 1
      %s191 = smul.addr %s190, 4
      %s192 = scalar_lea.vmem %s4, %s191
      %v193 = vld [vmem:[%s188] sm:$0x7]
      %v194 = vunpack.c.l.bf16 %v193
      %v195 = vld [vmem:[%s1] sm:$0x1f]
      %v196 = vadd.f32 %v194, %v195
      %vm197 = vcmask 520192
      %v198 = vsel %vm197, %v196, 0.0
      %199 = vadd.xlane.f32.xlu0 %v198
      %v200 = vpop.xlane.xlu0 %199
      %v201 = vrcp.pop 64.0
      %v202 = vmul.f32 %v200, %v201
      %v203 = vsub.f32 %v196, %v202
      %v204 = vmul.f32 %v203, %v203
      %v205 = vsel %vm197, %v204, 0.0
      %206 = vadd.xlane.f32.xlu0 %v205
      %v207 = vpop.xlane.xlu0 %206
      %v208 = vmul.f32 %v207, %v201
      %v209 = vadd.f32 %v208, 1e-05
      %v210 = vrsqrt.pop %v209
      %v211 = vmul.f32 %v203, %v210
      %v212 = vld [vmem:[%s2] sm:$0x1]
      %v214 = vlaneseq
      %v215 = vshrl.u32 %v214, 7
      %v216 = vsub.s32 0, %v215
      %v217 = vrot.slane %v212, %v216
      %v219 = vmul.f32 %v211, %v217
      %v220 = vld [vmem:[%s3] sm:$0x1]
      %v222 = vlaneseq
      %v223 = vshrl.u32 %v222, 7
      %v224 = vsub.s32 0, %v223
      %v225 = vrot.slane %v220, %v224
      %v227 = vadd.f32 %v219, %v225
      %v228 = vpack.c.bf16 %v227, %v227
      %vm229 = vcmask 518144
      %vm230 = vsmask.f32 2304
      %vm231 = vmand %vm229, %vm230
      %v232 = vld [vmem:[%s192] sm:$0x7]
      %v233 = vsel %vm231, %v228, %v232
      %234 = vst [vmem:[%s192] sm:$0x7] %v233
      %p235 = scmp.lt.s32.totalorder %s15, 1
      %s236 = scalar_select %p235, %s15, 1
      %s237 = smul.addr %s236, 4
      %s238 = scalar_lea.vmem %s4, %s237
      // Predicated region
      $region37: #{encode_image.12} parent=35 // pred_check
        %p239 = pneg %p122
      $region38: #{encode_image.12} parent=35 // pred_check_branch
        %241 = sbr.rel (%p239) target = $region40
      $region39: #{encode_image.12} parent=35 // pred_region
        _
      $region40: #{encode_image.12} parent=35 // pred_fallthru
        _
    $region36: #{encode_image.12} parent=5 // pred_fallthru
      _
    %p242 = scmp.le.s32.totalorder 2, %s10
    // Predicated region
    $region41: #{encode_image.12} parent=5 // pred_check
      %p243 = pneg %p242
    $region42: #{encode_image.12} parent=5 // pred_check_branch
      %245 = sbr.rel (%p243) target = $region44
    $region43: #{encode_image.12} parent=5 // pred_region
      %s246 = ssub.s32 %s10, 2
      // Predicated region
      $region45: #{encode_image.12} parent=43 // pred_check
        %p247 = pneg %p128
      $region46: #{encode_image.12} parent=43 // pred_check_branch
        %249 = sbr.rel (%p247) target = $region48
      $region47: #{encode_image.12} parent=43 // pred_region
        %p250 = scmp.lt.s32.totalorder %s16, 1
        %s251 = scalar_select %p250, %s16, 1
        %s252 = smul.addr %s251, 4
        %s253 = scalar_lea.vmem %s4, %s252
      $region48: #{encode_image.12} parent=43 // pred_fallthru
        _
    $region44: #{encode_image.12} parent=5 // pred_fallthru
      _
  $region6: #{encode_image.12} parent=0 // loop_footer
    %s14 = sadd.s32 1, %s10
  $region7: #{encode_image.12} parent=0 // loop_footer_branch
    %9 = sbr.rel target = $region3
  $region8: #{encode_image.12} parent=0 // loop_exit
    _

// kernel: encode_image.11
$region0: #{encode_image.11}
  #allocation0 [shape = 'u32[]', space=smem, size = 0x4, offset = 0x4, fixed_abs, tag = 'smem constant byte address 0x4 - core index']
  #allocation1 [shape = 'u32[144,128]{1,0:T(1,128)}', space=vmem, size = 0x12000, scoped, tag = 'internal scratch']
  %s0 = inlined_call_operand.vmem [shape: bf16[8,256], index: 0, kind: input, shape index: {}]
  %s1 = inlined_call_operand.vmem [shape: bf16[256,64], index: 1, kind: input, shape index: {}]
  %s2 = inlined_call_operand.vmem [shape: bf16[8,64], index: 2, kind: output, shape index: {}]
  %s3 = sld [smem:[#allocation0]]
  $region18: #{encode_image.11} parent=0
    _
  %s5 = ssub.s32 1, %s3
  %s6 = scalar_select 0, %s5, %s3
  // Predicated region
  $region2: #{encode_image.11} parent=0 // pred_check
    _
  $region3: #{encode_image.11} parent=0 // pred_check_branch
    %8 = sbr.rel (0) target = $region5
  $region4: #{encode_image.11} parent=0 // pred_region
    _
  $region5: #{encode_image.11} parent=0 // pred_fallthru
    _
  // Predicated region
  $region6: #{encode_image.11} parent=0 // pred_check
    _
  $region7: #{encode_image.11} parent=0 // pred_check_branch
    %10 = sbr.rel (0) target = $region9
  $region8: #{encode_image.11} parent=0 // pred_region
    _
  $region9: #{encode_image.11} parent=0 // pred_fallthru
    _
  %v12 = vld [vmem:[%s0] sm:$0xff]
  %v13 = vld [vmem:[%s1] sm:$0xf]
  %v14 = vld [vmem:[%s1 + $0x4] sm:$0xf]
  %v15 = vld [vmem:[%s1 + $0x8] sm:$0xf]
  %v16 = vld [vmem:[%s1 + $0xc] sm:$0xf]
  %v17 = vld [vmem:[%s1 + $0x10] sm:$0xf]
  %v18 = vld [vmem:[%s1 + $0x14] sm:$0xf]
  %v19 = vld [vmem:[%s1 + $0x18] sm:$0xf]
  %v20 = vld [vmem:[%s1 + $0x1c] sm:$0xf]
  %v21 = vld [vmem:[%s1 + $0x20] sm:$0xf]
  %v22 = vld [vmem:[%s1 + $0x24] sm:$0xf]
  %v23 = vld [vmem:[%s1 + $0x28] sm:$0xf]
  %v24 = vld [vmem:[%s1 + $0x2c] sm:$0xf]
  %v25 = vld [vmem:[%s1 + $0x30] sm:$0xf]
  %v26 = vld [vmem:[%s1 + $0x34] sm:$0xf]
  %v27 = vld [vmem:[%s1 + $0x38] sm:$0xf]
  %v28 = vld [vmem:[%s1 + $0x3c] sm:$0xf]
  %v29 = vld [vmem:[%s1 + $0x40] sm:$0xf]
  %v30 = vld [vmem:[%s1 + $0x44] sm:$0xf]
  %v31 = vld [vmem:[%s1 + $0x48] sm:$0xf]
  %v32 = vld [vmem:[%s1 + $0x4c] sm:$0xf]
  %v33 = vld [vmem:[%s1 + $0x50] sm:$0xf]
  %v34 = vld [vmem:[%s1 + $0x54] sm:$0xf]
  %v35 = vld [vmem:[%s1 + $0x58] sm:$0xf]
  %v36 = vld [vmem:[%s1 + $0x5c] sm:$0xf]
  %v37 = vld [vmem:[%s1 + $0x60] sm:$0xf]
  %v38 = vld [vmem:[%s1 + $0x64] sm:$0xf]
  %v39 = vld [vmem:[%s1 + $0x68] sm:$0xf]
  %v40 = vld [vmem:[%s1 + $0x6c] sm:$0xf]
  %v41 = vld [vmem:[%s1 + $0x70] sm:$0xf]
  %v42 = vld [vmem:[%s1 + $0x74] sm:$0xf]
  %v43 = vld [vmem:[%s1 + $0x78] sm:$0xf]
  %v44 = vld [vmem:[%s1 + $0x7c] sm:$0xf]
  %v46 = vunpack.c.l.b16 %v12
  %v47 = vunpack.c.h.b16 %v12
  %v48 = vpack.c.b16 %v46, %v46
  %v49 = vpack.c.b16 %v47, %v47
  %v84 = vunpack.c.l.b16 %v13
  %v85 = vunpack.c.l.b16 %v14
  %v86 = vunpack.c.l.b16 %v15
  %v87 = vunpack.c.l.b16 %v16
  %v88 = vunpack.c.l.b16 %v17
  %v89 = vunpack.c.l.b16 %v18
  %v90 = vunpack.c.l.b16 %v19
  %v91 = vunpack.c.l.b16 %v20
  %v92 = vunpack.c.l.b16 %v21
  %v93 = vunpack.c.l.b16 %v22
  %v94 = vunpack.c.l.b16 %v23
  %v95 = vunpack.c.l.b16 %v24
  %v96 = vunpack.c.l.b16 %v25
  %v97 = vunpack.c.l.b16 %v26
  %v98 = vunpack.c.l.b16 %v27
  %v99 = vunpack.c.l.b16 %v28
  %v100 = vunpack.c.l.b16 %v29
  %v101 = vunpack.c.l.b16 %v30
  %v102 = vunpack.c.l.b16 %v31
  %v103 = vunpack.c.l.b16 %v32
  %v104 = vunpack.c.l.b16 %v33
  %v105 = vunpack.c.l.b16 %v34
  %v106 = vunpack.c.l.b16 %v35
  %v107 = vunpack.c.l.b16 %v36
  %v108 = vunpack.c.l.b16 %v37
  %v109 = vunpack.c.l.b16 %v38
  %v110 = vunpack.c.l.b16 %v39
  %v111 = vunpack.c.l.b16 %v40
  %v112 = vunpack.c.l.b16 %v41
  %v113 = vunpack.c.l.b16 %v42
  %v114 = vunpack.c.l.b16 %v43
  %v115 = vunpack.c.l.b16 %v44
  %v116 = vpack.c.b16 %v85, %v84
  %v117 = vpack.c.b16 %v87, %v86
  %v118 = vpack.c.b16 %v89, %v88
  %v119 = vpack.c.b16 %v91, %v90
  %v120 = vpack.c.b16 %v93, %v92
  %v121 = vpack.c.b16 %v95, %v94
  %v122 = vpack.c.b16 %v97, %v96
  %v123 = vpack.c.b16 %v99, %v98
  %v124 = vpack.c.b16 %v101, %v100
  %v125 = vpack.c.b16 %v103, %v102
  %v126 = vpack.c.b16 %v105, %v104
  %v127 = vpack.c.b16 %v107, %v106
  %v128 = vpack.c.b16 %v109, %v108
  %v129 = vpack.c.b16 %v111, %v110
  %v130 = vpack.c.b16 %v113, %v112
  %v131 = vpack.c.b16 %v115, %v114
  %148 = vmatprep.subr.bf16.mxu0 0
  %149 = vmatpush1.bf16.msra.mxu0 %v116
  %150 = vmatprep.subr.bf16.mxu0 0
  %151 = vmatpush1.bf16.msra.mxu0 %v117
  %152 = vmatprep.subr.bf16.mxu0 0
  %153 = vmatpush1.bf16.msra.mxu0 %v118
  %154 = vmatprep.subr.bf16.mxu0 0
  %155 = vmatpush1.bf16.msra.mxu0 %v119
  %156 = vmatprep.subr.bf16.mxu0 0
  %157 = vmatpush1.bf16.msra.mxu0 %v120
  %158 = vmatprep.subr.bf16.mxu0 0
  %159 = vmatpush1.bf16.msra.mxu0 %v121
  %160 = vmatprep.subr.bf16.mxu0 0
  %161 = vmatpush1.bf16.msra.mxu0 %v122
  %162 = vmatprep.subr.bf16.mxu0 0
  %163 = vmatpush1.bf16.msra.mxu0 %v123
  %164 = vmatprep.subr.bf16.mxu0 0
  %165 = vmatpush1.bf16.msra.mxu0 %v124
  %166 = vmatprep.subr.bf16.mxu0 0
  %167 = vmatpush1.bf16.msra.mxu0 %v125
  %168 = vmatprep.subr.bf16.mxu0 0
  %169 = vmatpush1.bf16.msra.mxu0 %v126
  %170 = vmatprep.subr.bf16.mxu0 0
  %171 = vmatpush1.bf16.msra.mxu0 %v127
  %172 = vmatprep.subr.bf16.mxu0 0
  %173 = vmatpush1.bf16.msra.mxu0 %v128
  %174 = vmatprep.subr.bf16.mxu0 0
  %175 = vmatpush1.bf16.msra.mxu0 %v129
  %176 = vmatprep.subr.bf16.mxu0 0
  %177 = vmatpush1.bf16.msra.mxu0 %v130
  %178 = vmatprep.subr.bf16.mxu0 0
  %179 = vmatpush1.bf16.msra.mxu0 %v131
  %180 = vmatprep.mubr.bf16.mxu0 %v49
  %181 = vmatmul.mubr.bf16.gmra.mrb[0].mxu0 %v48
  %v182 = vpop.f32.mrb[0].mxu0
  %v183 = vadd.f32 0.0, %v182
  %v184 = vpop.f32.mrb[0].mxu0
  %v185 = vpop.f32.mrb[0].mxu0
  %v186 = vpop.f32.mrb[0].mxu0
  %187 = vdwg.mxu0
  %v188 = vpack.c.bf16 %v183, %v183
  %vm189 = vcmask 519168
  %190 = vst.msk [vmem:[%s2] sm:$0xf] %vm189, %v188
  // Predicated region
  $region10: #{encode_image.11} parent=0 // pred_check
    _
  $region11: #{encode_image.11} parent=0 // pred_check_branch
    %192 = sbr.rel (0) target = $region13
  $region12: #{encode_image.11} parent=0 // pred_region
    _
  $region13: #{encode_image.11} parent=0 // pred_fallthru
    _
  // Predicated region
  $region14: #{encode_image.11} parent=0 // pred_check
    _
  $region15: #{encode_image.11} parent=0 // pred_check_branch
    %194 = sbr.rel (0) target = $region17
  $region16: #{encode_image.11} parent=0 // pred_region
    _
  $region17: #{encode_image.11} parent=0 // pred_fallthru
    _

// kernel: encode_image.14
$region0: #{encode_image.14}
  #allocation0 [shape = 'u32[]', space=smem, size = 0x4, offset = 0x4, fixed_abs, tag = 'smem constant byte address 0x4 - core index']
  #allocation1 [shape = 'u32[144,128]{1,0:T(1,128)}', space=vmem, size = 0x12000, scoped, tag = 'internal scratch']
  %s0 = inlined_call_operand.vmem [shape: bf16[2,5,192], index: 0, kind: input, shape index: {}]
  %s1 = inlined_call_operand.vmem [shape: bf16[64,64], index: 1, kind: input, shape index: {}]
  %s2 = inlined_call_operand.vmem [shape: f32[1,64], index: 2, kind: input, shape index: {}]
  %s3 = inlined_call_operand.vmem [shape: bf16[2,5,64], index: 3, kind: input, shape index: {}]
  %s4 = inlined_call_operand.vmem [shape: bf16[2,5,64], index: 4, kind: output, shape index: {}]
  %s5 = sld [smem:[#allocation0]]
  $region49: #{encode_image.14} parent=0
    _
  %s7 = ssub.s32 1, %s5
  %s8 = scalar_select 0, %s7, %s5
  loop: start=0, step=1, limit=4
  $region2: #{encode_image.14} parent=0 // loop_pre_header
    _
  $region3: #{encode_image.14} parent=0 // loop_header
    %s10 = sphi 0, %s14
    %p11 = scmp.ge.s32.totalorder %s10, 4
    %s20 = sphi 0, %s22
    %s23 = sphi 0, %s20
    %s24 = sphi 0, %s23
    %s40 = sphi 0, %s24
    %s44 = sphi 0, %s44
    %s46 = sphi 0, %s44
    %s47 = sphi 0, %s46
    %s61 = sphi 0, %s47
    %s65 = sphi 0, %s65
    %s67 = sphi 0, %s65
    %s68 = sphi 0, %s67
    %s82 = sphi 0, %s68
    %s88 = sphi 0, %s90
    %s91 = sphi 0, %s88
    %s92 = sphi 0, %s91
    %s108 = sphi 0, %s92
    %s114 = sphi 0, %s116
    %s117 = sphi 0, %s114
    %s118 = sphi 0, %s117
    %s134 = sphi 0, %s118
  $region4: #{encode_image.14} parent=0 // loop_header_branch
    %13 = sbr.rel (%p11) target = $region8
  $region5: #{encode_image.14} parent=0 // loop_body
    %s15 = ssub.s32 %s10, 1
    %s16 = ssub.s32 %s10, 2
    %s17 = sadd.s32 %s10, 1
    %s18 = ssub.s32 %s10, %s17
    %p19 = scmp.eq.s32.totalorder %s18, 0
    %s21 = sadd.s32 %s20, 1
    %s22 = scalar_select %p19, %s20, %s21
    %p25 = pneg %p19
    %p26 = scmp.eq.s32.totalorder %s10, 1
    %p27 = por %p25, %p26
    %p28 = scmp.ne.s32.totalorder %s20, %s23
    %p29 = scmp.eq.s32.totalorder %s10, 0
    %p30 = por %p28, %p29
    %p31 = scmp.ne.s32.totalorder %s20, %s23
    %p32 = scmp.eq.s32.totalorder %s15, 1
    %p33 = por %p31, %p32
    %p34 = scmp.ne.s32.totalorder %s23, %s24
    %p35 = scmp.eq.s32.totalorder %s15, 0
    %p36 = por %p34, %p35
    %p37 = scmp.ne.s32.totalorder %s23, %s24
    %p38 = scmp.eq.s32.totalorder %s16, 1
    %p39 = por %p37, %p38
    %p41 = scmp.ne.s32.totalorder %s24, %s40
    %p42 = scmp.eq.s32.totalorder %s16, 0
    %p43 = por %p41, %p42
    %s45 = sadd.s32 %s44, 1
    %p48 = scmp.eq.s32.totalorder %s10, 1
    %p49 = scmp.ne.s32.totalorder %s44, %s46
    %p50 = scmp.eq.s32.totalorder %s10, 0
    %p51 = por %p49, %p50
    %p52 = scmp.ne.s32.totalorder %s44, %s46
    %p53 = scmp.eq.s32.totalorder %s15, 1
    %p54 = por %p52, %p53
    %p55 = scmp.ne.s32.totalorder %s46, %s47
    %p56 = scmp.eq.s32.totalorder %s15, 0
    %p57 = por %p55, %p56
    %p58 = scmp.ne.s32.totalorder %s46, %s47
    %p59 = scmp.eq.s32.totalorder %s16, 1
    %p60 = por %p58, %p59
    %p62 = scmp.ne.s32.totalorder %s47, %s61
    %p63 = scmp.eq.s32.totalorder %s16, 0
    %p64 = por %p62, %p63
    %s66 = sadd.s32 %s65, 1
    %p69 = scmp.eq.s32.totalorder %s10, 1
    %p70 = scmp.ne.s32.totalorder %s65, %s67
    %p71 = scmp.eq.s32.totalorder %s10, 0
    %p72 = por %p70, %p71
    %p73 = scmp.ne.s32.totalorder %s65, %s67
    %p74 = scmp.eq.s32.totalorder %s15, 1
    %p75 = por %p73, %p74
    %p76 = scmp.ne.s32.totalorder %s67, %s68
    %p77 = scmp.eq.s32.totalorder %s15, 0
    %p78 = por %p76, %p77
    %p79 = scmp.ne.s32.totalorder %s67, %s68
    %p80 = scmp.eq.s32.totalorder %s16, 1
    %p81 = por %p79, %p80
    %p83 = scmp.ne.s32.totalorder %s68, %s82
    %p84 = scmp.eq.s32.totalorder %s16, 0
    %p85 = por %p83, %p84
    %s86 = ssub.s32 %s10, %s17
    %p87 = scmp.eq.s32.totalorder %s86, 0
    %s89 = sadd.s32 %s88, 1
    %s90 = scalar_select %p87, %s88, %s89
    %p93 = pneg %p87
    %p94 = scmp.eq.s32.totalorder %s10, 1
    %p95 = por %p93, %p94
    %p96 = scmp.ne.s32.totalorder %s88, %s91
    %p97 = scmp.eq.s32.totalorder %s10, 0
    %p98 = por %p96, %p97
    %p99 = scmp.ne.s32.totalorder %s88, %s91
    %p100 = scmp.eq.s32.totalorder %s15, 1
    %p101 = por %p99, %p100
    %p102 = scmp.ne.s32.totalorder %s91, %s92
    %p103 = scmp.eq.s32.totalorder %s15, 0
    %p104 = por %p102, %p103
    %p105 = scmp.ne.s32.totalorder %s91, %s92
    %p106 = scmp.eq.s32.totalorder %s16, 1
    %p107 = por %p105, %p106
    %p109 = scmp.ne.s32.totalorder %s92, %s108
    %p110 = scmp.eq.s32.totalorder %s16, 0
    %p111 = por %p109, %p110
    %s112 = ssub.s32 %s10, %s17
    %p113 = scmp.eq.s32.totalorder %s112, 0
    %s115 = sadd.s32 %s114, 1
    %s116 = scalar_select %p113, %s114, %s115
    %p119 = pneg %p113
    %p120 = scmp.eq.s32.totalorder %s10, 1
    %p121 = por %p119, %p120
    %p122 = scmp.ne.s32.totalorder %s114, %s117
    %p123 = scmp.eq.s32.totalorder %s10, 0
    %p124 = por %p122, %p123
    %p125 = scmp.ne.s32.totalorder %s114, %s117
    %p126 = scmp.eq.s32.totalorder %s15, 1
    %p127 = por %p125, %p126
    %p128 = scmp.ne.s32.totalorder %s117, %s118
    %p129 = scmp.eq.s32.totalorder %s15, 0
    %p130 = por %p128, %p129
    %p131 = scmp.ne.s32.totalorder %s117, %s118
    %p132 = scmp.eq.s32.totalorder %s16, 1
    %p133 = por %p131, %p132
    %p135 = scmp.ne.s32.totalorder %s118, %s134
    %p136 = scmp.eq.s32.totalorder %s16, 0
    %p137 = por %p135, %p136
    %p138 = scmp.le.s32.totalorder 1, %s10
    %p139 = scmp.lt.s32.totalorder %s10, 3
    %p140 = pnand %p138, %p139
    %p141 = pneg %p140
    // Predicated region
    $region9: #{encode_image.14} parent=5 // pred_check
      _
    $region10: #{encode_image.14} parent=5 // pred_check_branch
      %143 = sbr.rel (%p140) target = $region12
    $region11: #{encode_image.14} parent=5 // pred_region
      %s144 = ssub.s32 %s10, 1
      // Predicated region
      $region13: #{encode_image.14} parent=11 // pred_check
        %p145 = pneg %p57
      $region14: #{encode_image.14} parent=11 // pred_check_branch
        %147 = sbr.rel (%p145) target = $region16
      $region15: #{encode_image.14} parent=11 // pred_region
        _
      $region16: #{encode_image.14} parent=11 // pred_fallthru
        _
      // Predicated region
      $region17: #{encode_image.14} parent=11 // pred_check
        %p148 = pneg %p78
      $region18: #{encode_image.14} parent=11 // pred_check_branch
        %150 = sbr.rel (%p148) target = $region20
      $region19: #{encode_image.14} parent=11 // pred_region
        _
      $region20: #{encode_image.14} parent=11 // pred_fallthru
        _
    $region12: #{encode_image.14} parent=5 // pred_fallthru
      _
    %p151 = scmp.lt.s32.totalorder %s10, 2
    // Predicated region
    $region21: #{encode_image.14} parent=5 // pred_check
      %p152 = pneg %p151
    $region22: #{encode_image.14} parent=5 // pred_check_branch
      %154 = sbr.rel (%p152) target = $region24
    $region23: #{encode_image.14} parent=5 // pred_region
      // Predicated region
      $region25: #{encode_image.14} parent=23 // pred_check
        %p155 = pneg %p30
      $region26: #{encode_image.14} parent=23 // pred_check_branch
        %157 = sbr.rel (%p155) target = $region28
      $region27: #{encode_image.14} parent=23 // pred_region
        %p158 = scmp.lt.s32.totalorder %s10, 1
        %s159 = scalar_select %p158, %s10, 1
        %s160 = smul.addr %s159, 2
        %s161 = smul.addr %s160, 4
        %s162 = scalar_lea.vmem %s0, %s161
      $region28: #{encode_image.14} parent=23 // pred_fallthru
        _
      // Predicated region
      $region29: #{encode_image.14} parent=23 // pred_check
        %p163 = pneg %p98
      $region30: #{encode_image.14} parent=23 // pred_check_branch
        %165 = sbr.rel (%p163) target = $region32
      $region31: #{encode_image.14} parent=23 // pred_region
        %p166 = scmp.lt.s32.totalorder %s10, 1
        %s167 = scalar_select %p166, %s10, 1
        %s168 = smul.addr %s167, 4
        %s169 = scalar_lea.vmem %s3, %s168
      $region32: #{encode_image.14} parent=23 // pred_fallthru
        _
    $region24: #{encode_image.14} parent=5 // pred_fallthru
      _
    %p170 = scmp.le.s32.totalorder 1, %s10
    %p171 = scmp.lt.s32.totalorder %s10, 3
    %p172 = pnand %p170, %p171
    %p173 = pneg %p172
    // Predicated region
    $region33: #{encode_image.14} parent=5 // pred_check
      _
    $region34: #{encode_image.14} parent=5 // pred_check_branch
      %175 = sbr.rel (%p172) target = $region36
    $region35: #{encode_image.14} parent=5 // pred_region
      %s176 = ssub.s32 %s10, 1
      %p177 = scmp.lt.s32.totalorder %s15, 1
      %s178 = scalar_select %p177, %s15, 1
      %s179 = smul.addr %s178, 2
      %s180 = smul.addr %s179, 4
      %s181 = scalar_lea.vmem %s0, %s180
      %p182 = pneg %p36
      %p183 = pneg %p33
      %p184 = pneg %p57
      %p185 = pneg %p54
      %p186 = pneg %p78
      %p187 = pneg %p75
      %p188 = scmp.lt.s32.totalorder %s15, 1
      %s189 = scalar_select %p188, %s15, 1
      %s190 = smul.addr %s189, 4
      %s191 = scalar_lea.vmem %s3, %s190
      %p192 = pneg %p104
      %p193 = pneg %p101
      %p194 = pneg %p130
      %p195 = pneg %p127
      %p196 = scmp.lt.s32.totalorder %s15, 1
      %s197 = scalar_select %p196, %s15, 1
      %s198 = smul.addr %s197, 4
      %s199 = scalar_lea.vmem %s4, %s198
      %p200 = scmp.lt.s32.totalorder %s15, 1
      %s201 = scalar_select %p200, %s15, 1
      %s202 = smul.addr %s201, 2
      %s203 = smul.addr %s202, 4
      %s204 = scalar_lea.vmem %s0, %s203
      %p205 = scmp.lt.s32.totalorder %s15, 1
      %s206 = scalar_select %p205, %s15, 1
      %s207 = smul.addr %s206, 4
      %s208 = scalar_lea.vmem %s3, %s207
      %p209 = scmp.lt.s32.totalorder %s15, 1
      %s210 = scalar_select %p209, %s15, 1
      %s211 = smul.addr %s210, 4
      %s212 = scalar_lea.vmem %s4, %s211
      %v214 = vld [vmem:[%s204] sm:$0x77]
      %216 = vrot.lane.b32.xlu0 %v214, 96
      %v217 = vpop.permute.xlu0 %216
      %v218 = vrot.slane %v214, 4
      %v219 = vrot.slane %v217, 4
      %v220 = vunpack.c.l.b16 %v214
      %v221 = vpack.c.b16 %v220, %v220
      %222 = vrot.lane.b32.xlu0 %v221, 64
      %v223 = vpop.permute.xlu0 %222
      %vm224 = vcmask 261120
      %v226 = vsel %vm224, %v214, 0
      %v229 = vsel %vm224, %v223, 0
      %231 = vmatprep.subr.bf16.mxu0 0
      %232 = vmatpush1.bf16.xpose.msra.mxu0 %v229
      %233 = vmatprep.subr.bf16.mxu0 0
      %234 = vmatpush1.bf16.xpose.msra.mxu0 0
      %235 = vmatprep.subr.bf16.mxu0 0
      %236 = vmatpush1.bf16.xpose.msra.mxu0 0
      %237 = vmatprep.subr.bf16.mxu0 0
      %238 = vmatpush1.bf16.xpose.msra.mxu0 0
      %239 = vmatprep.subr.bf16.mxu0 0
      %240 = vmatpush1.bf16.xpose.msra.mxu0 0
      %241 = vmatprep.subr.bf16.mxu0 0
      %242 = vmatpush1.bf16.xpose.msra.mxu0 0
      %243 = vmatprep.subr.bf16.mxu0 0
      %244 = vmatpush1.bf16.xpose.msra.mxu0 0
      %245 = vmatprep.subr.bf16.mxu0 0
      %246 = vmatpush1.bf16.xpose.msra.mxu0 0
      %247 = vmatprep.subr.bf16.mxu0 0
      %248 = vmatpush1.bf16.xpose.msra.mxu0 0
      %249 = vmatprep.subr.bf16.mxu0 0
      %250 = vmatpush1.bf16.xpose.msra.mxu0 0
      %251 = vmatprep.subr.bf16.mxu0 0
      %252 = vmatpush1.bf16.xpose.msra.mxu0 0
      %253 = vmatprep.subr.bf16.mxu0 0
      %254 = vmatpush1.bf16.xpose.msra.mxu0 0
      %255 = vmatprep.subr.bf16.mxu0 0
      %256 = vmatpush1.bf16.xpose.msra.mxu0 0
      %257 = vmatprep.subr.bf16.mxu0 0
      %258 = vmatpush1.bf16.xpose.msra.mxu0 0
      %259 = vmatprep.subr.bf16.mxu0 0
      %260 = vmatpush1.bf16.xpose.msra.mxu0 0
      %261 = vmatprep.subr.bf16.mxu0 0
      %262 = vmatpush1.bf16.xpose.msra.mxu0 0
      %263 = vmatprep.mubr.bf16.mxu0 0
      %264 = vmatmul.mubr.bf16.gmra.mrb[0].mxu0 %v226
      %v265 = vpop.f32.mrb[0].mxu0
      %v266 = vadd.f32 0.0, %v265
      %v267 = vpop.f32.mrb[0].mxu0
      %v268 = vpop.f32.mrb[0].mxu0
      %v269 = vpop.f32.mrb[0].mxu0
      %270 = vdwg.mxu0
      %v271 = vunpack.c.l.b16 %v217
      %v272 = vpack.c.b16 %v271, %v271
      %273 = vrot.lane.b32.xlu0 %v272, 64
      %v274 = vpop.permute.xlu0 %273
      %v276 = vsel %vm224, %v217, 0
      %v279 = vsel %vm224, %v274, 0
      %281 = vmatprep.subr.bf16.mxu0 0
      %282 = vmatpush1.bf16.xpose.msra.mxu0 %v279
      %283 = vmatprep.subr.bf16.mxu0 0
      %284 = vmatpush1.bf16.xpose.msra.mxu0 0
      %285 = vmatprep.subr.bf16.mxu0 0
      %286 = vmatpush1.bf16.xpose.msra.mxu0 0
      %287 = vmatprep.subr.bf16.mxu0 0
      %288 = vmatpush1.bf16.xpose.msra.mxu0 0
      %289 = vmatprep.subr.bf16.mxu0 0
      %290 = vmatpush1.bf16.xpose.msra.mxu0 0
      %291 = vmatprep.subr.bf16.mxu0 0
      %292 = vmatpush1.bf16.xpose.msra.mxu0 0
      %293 = vmatprep.subr.bf16.mxu0 0
      %294 = vmatpush1.bf16.xpose.msra.mxu0 0
      %295 = vmatprep.subr.bf16.mxu0 0
      %296 = vmatpush1.bf16.xpose.msra.mxu0 0
      %297 = vmatprep.subr.bf16.mxu0 0
      %298 = vmatpush1.bf16.xpose.msra.mxu0 0
      %299 = vmatprep.subr.bf16.mxu0 0
      %300 = vmatpush1.bf16.xpose.msra.mxu0 0
      %301 = vmatprep.subr.bf16.mxu0 0
      %302 = vmatpush1.bf16.xpose.msra.mxu0 0
      %303 = vmatprep.subr.bf16.mxu0 0
      %304 = vmatpush1.bf16.xpose.msra.mxu0 0
      %305 = vmatprep.subr.bf16.mxu0 0
      %306 = vmatpush1.bf16.xpose.msra.mxu0 0
      %307 = vmatprep.subr.bf16.mxu0 0
      %308 = vmatpush1.bf16.xpose.msra.mxu0 0
      %309 = vmatprep.subr.bf16.mxu0 0
      %310 = vmatpush1.bf16.xpose.msra.mxu0 0
      %311 = vmatprep.subr.bf16.mxu0 0
      %312 = vmatpush1.bf16.xpose.msra.mxu0 0
      %313 = vmatprep.mubr.bf16.mxu0 0
      %314 = vmatmul.mubr.bf16.gmra.mrb[0].mxu0 %v276
      %v315 = vpop.f32.mrb[0].mxu0
      %v316 = vadd.f32 0.0, %v315
      %v317 = vpop.f32.mrb[0].mxu0
      %v318 = vpop.f32.mrb[0].mxu0
      %v319 = vpop.f32.mrb[0].mxu0
      %320 = vdwg.mxu0
      %vm321 = vcmask 36864
      %v322 = vsel %vm321, %v266, -inf
      %323 = vmax.xlane.f32.xlu0 %v322
      %v324 = vpop.xlane.xlu0 %323
      %v325 = vsel %vm321, %v316, -inf
      %326 = vmax.xlane.f32.xlu0 %v325
      %v327 = vpop.xlane.xlu0 %326
      %v328 = vsub.f32 %v266, %v324
      %v329 = vsub.f32 %v316, %v327
      %v330 = vmul.f32 %v328, 1.442695
      %v331 = vpow.pop %v330
      %v332 = vmul.f32 %v329, 1.442695
      %v333 = vpow.pop %v332
      %v334 = vsel %vm321, %v331, 0.0
      %335 = vadd.xlane.f32.xlu0 %v334
      %v336 = vpop.xlane.xlu0 %335
      %v337 = vsel %vm321, %v333, 0.0
      %338 = vadd.xlane.f32.xlu0 %v337
      %v339 = vpop.xlane.xlu0 %338
      %v340 = vpack.c.bf16 %v331, %v331
      %v341 = vpack.c.bf16 %v333, %v333
      %vm342 = vcmask 39936
      %v344 = vsel %vm342, %v340, 0
      %vm346 = vcmask 1041408
      %vm347 = vcmask 1042432
      %v348 = vsel %vm346, 4294967295, 65535
      %v349 = vsel %vm347, %v348, 0
      %v351 = vand.u32 %v218, %v349
      %353 = vmatprep.subr.bf16.mxu0 0
      %354 = vmatpush1.bf16.msra.mxu0 %v351
      %355 = vmatprep.subr.bf16.mxu0 0
      %356 = vmatpush1.bf16.msra.mxu0 0
      %357 = vmatprep.subr.bf16.mxu0 0
      %358 = vmatpush1.bf16.msra.mxu0 0
      %359 = vmatprep.subr.bf16.mxu0 0
      %360 = vmatpush1.bf16.msra.mxu0 0
      %361 = vmatprep.subr.bf16.mxu0 0
      %362 = vmatpush1.bf16.msra.mxu0 0
      %363 = vmatprep.subr.bf16.mxu0 0
      %364 = vmatpush1.bf16.msra.mxu0 0
      %365 = vmatprep.subr.bf16.mxu0 0
      %366 = vmatpush1.bf16.msra.mxu0 0
      %367 = vmatprep.subr.bf16.mxu0 0
      %368 = vmatpush1.bf16.msra.mxu0 0
      %369 = vmatprep.subr.bf16.mxu0 0
      %370 = vmatpush1.bf16.msra.mxu0 0
      %371 = vmatprep.subr.bf16.mxu0 0
      %372 = vmatpush1.bf16.msra.mxu0 0
      %373 = vmatprep.subr.bf16.mxu0 0
      %374 = vmatpush1.bf16.msra.mxu0 0
      %375 = vmatprep.subr.bf16.mxu0 0
      %376 = vmatpush1.bf16.msra.mxu0 0
      %377 = vmatprep.subr.bf16.mxu0 0
      %378 = vmatpush1.bf16.msra.mxu0 0
      %379 = vmatprep.subr.bf16.mxu0 0
      %380 = vmatpush1.bf16.msra.mxu0 0
      %381 = vmatprep.subr.bf16.mxu0 0
      %382 = vmatpush1.bf16.msra.mxu0 0
      %383 = vmatprep.subr.bf16.mxu0 0
      %384 = vmatpush1.bf16.msra.mxu0 0
      %385 = vmatprep.mubr.bf16.mxu0 0
      %386 = vmatmul.mubr.bf16.gmra.mrb[0].mxu0 %v344
      %v387 = vpop.f32.mrb[0].mxu0
      %v388 = vadd.f32 0.0, %v387
      %v389 = vpop.f32.mrb[0].mxu0
      %v390 = vpop.f32.mrb[0].mxu0
      %v391 = vpop.f32.mrb[0].mxu0
      %392 = vdwg.mxu0
      %v394 = vsel %vm342, %v341, 0
      %v397 = vand.u32 %v219, %v349
      %399 = vmatprep.subr.bf16.mxu0 0
      %400 = vmatpush1.bf16.msra.mxu0 %v397
      %401 = vmatprep.subr.bf16.mxu0 0
      %402 = vmatpush1.bf16.msra.mxu0 0
      %403 = vmatprep.subr.bf16.mxu0 0
      %404 = vmatpush1.bf16.msra.mxu0 0
      %405 = vmatprep.subr.bf16.mxu0 0
      %406 = vmatpush1.bf16.msra.mxu0 0
      %407 = vmatprep.subr.bf16.mxu0 0
      %408 = vmatpush1.bf16.msra.mxu0 0
      %409 = vmatprep.subr.bf16.mxu0 0
      %410 = vmatpush1.bf16.msra.mxu0 0
      %411 = vmatprep.subr.bf16.mxu0 0
      %412 = vmatpush1.bf16.msra.mxu0 0
      %413 = vmatprep.subr.bf16.mxu0 0
      %414 = vmatpush1.bf16.msra.mxu0 0
      %415 = vmatprep.subr.bf16.mxu0 0
      %416 = vmatpush1.bf16.msra.mxu0 0
      %417 = vmatprep.subr.bf16.mxu0 0
      %418 = vmatpush1.bf16.msra.mxu0 0
      %419 = vmatprep.subr.bf16.mxu0 0
      %420 = vmatpush1.bf16.msra.mxu0 0
      %421 = vmatprep.subr.bf16.mxu0 0
      %422 = vmatpush1.bf16.msra.mxu0 0
      %423 = vmatprep.subr.bf16.mxu0 0
      %424 = vmatpush1.bf16.msra.mxu0 0
      %425 = vmatprep.subr.bf16.mxu0 0
      %426 = vmatpush1.bf16.msra.mxu0 0
      %427 = vmatprep.subr.bf16.mxu0 0
      %428 = vmatpush1.bf16.msra.mxu0 0
      %429 = vmatprep.subr.bf16.mxu0 0
      %430 = vmatpush1.bf16.msra.mxu0 0
      %431 = vmatprep.mubr.bf16.mxu0 0
      %432 = vmatmul.mubr.bf16.gmra.mrb[0].mxu0 %v394
      %v433 = vpop.f32.mrb[0].mxu0
      %v434 = vadd.f32 0.0, %v433
      %v435 = vpop.f32.mrb[0].mxu0
      %v436 = vpop.f32.mrb[0].mxu0
      %v437 = vpop.f32.mrb[0].mxu0
      %438 = vdwg.mxu0
      %v439 = vrcp.pop %v336
      %v440 = vrcp.pop %v339
      %v441 = vmul.f32 %v388, %v439
      %v442 = vmul.f32 %v434, %v440
      %v443 = vld [vmem:[%s1] sm:$0xf]
      %v444 = vld [vmem:[%s1 + $0x4] sm:$0xf]
      %v445 = vld [vmem:[%s1 + $0x8] sm:$0xf]
      %v446 = vld [vmem:[%s1 + $0xc] sm:$0xf]
      %v447 = vld [vmem:[%s1 + $0x10] sm:$0xf]
      %v448 = vld [vmem:[%s1 + $0x14] sm:$0xf]
      %v449 = vld [vmem:[%s1 + $0x18] sm:$0xf]
      %v450 = vld [vmem:[%s1 + $0x1c] sm:$0xf]
      %v451 = vpack.c.bf16 %v441, %v441
      %v452 = vpack.c.bf16 %v442, %v442
      %v457 = vunpack.c.l.b16 %v443
      %v458 = vunpack.c.l.b16 %v444
      %v459 = vunpack.c.l.b16 %v445
      %v460 = vunpack.c.l.b16 %v446
      %v461 = vpack.c.b16 %v458, %v457
      %v462 = vpack.c.b16 %v460, %v459
      %v466 = vsel %vm224, %v451, 0
      %468 = vmatprep.subr.bf16.mxu0 0
      %469 = vmatpush1.bf16.msra.mxu0 %v461
      %470 = vmatprep.subr.bf16.mxu0 0
      %471 = vmatpush1.bf16.msra.mxu0 %v462
      %472 = vmatprep.subr.bf16.mxu0 0
      %473 = vmatpush1.bf16.msra.mxu0 0
      %474 = vmatprep.subr.bf16.mxu0 0
      %475 = vmatpush1.bf16.msra.mxu0 0
      %476 = vmatprep.subr.bf16.mxu0 0
      %477 = vmatpush1.bf16.msra.mxu0 0
      %478 = vmatprep.subr.bf16.mxu0 0
      %479 = vmatpush1.bf16.msra.mxu0 0
      %480 = vmatprep.subr.bf16.mxu0 0
      %481 = vmatpush1.bf16.msra.mxu0 0
      %482 = vmatprep.subr.bf16.mxu0 0
      %483 = vmatpush1.bf16.msra.mxu0 0
      %484 = vmatprep.subr.bf16.mxu0 0
      %485 = vmatpush1.bf16.msra.mxu0 0
      %486 = vmatprep.subr.bf16.mxu0 0
      %487 = vmatpush1.bf16.msra.mxu0 0
      %488 = vmatprep.subr.bf16.mxu0 0
      %489 = vmatpush1.bf16.msra.mxu0 0
      %490 = vmatprep.subr.bf16.mxu0 0
      %491 = vmatpush1.bf16.msra.mxu0 0
      %492 = vmatprep.subr.bf16.mxu0 0
      %493 = vmatpush1.bf16.msra.mxu0 0
      %494 = vmatprep.subr.bf16.mxu0 0
      %495 = vmatpush1.bf16.msra.mxu0 0
      %496 = vmatprep.subr.bf16.mxu0 0
      %497 = vmatpush1.bf16.msra.mxu0 0
      %498 = vmatprep.subr.bf16.mxu0 0
      %499 = vmatpush1.bf16.msra.mxu0 0
      %500 = vmatprep.mubr.bf16.mxu0 0
      %501 = vmatmul.mubr.bf16.gmra.mrb[0].mxu0 %v466
      %v502 = vpop.f32.mrb[0].mxu0
      %v503 = vadd.f32 0.0, %v502
      %v504 = vpop.f32.mrb[0].mxu0
      %v505 = vpop.f32.mrb[0].mxu0
      %v506 = vpop.f32.mrb[0].mxu0
      %507 = vdwg.mxu0
      %v512 = vunpack.c.l.b16 %v447
      %v513 = vunpack.c.l.b16 %v448
      %v514 = vunpack.c.l.b16 %v449
      %v515 = vunpack.c.l.b16 %v450
      %v516 = vpack.c.b16 %v513, %v512
      %v517 = vpack.c.b16 %v515, %v514
      %v521 = vsel %vm224, %v452, 0
      %523 = vmatprep.subr.bf16.mxu0 0
      %524 = vmatpush1.bf16.msra.mxu0 %v516
      %525 = vmatprep.subr.bf16.mxu0 0
      %526 = vmatpush1.bf16.msra.mxu0 %v517
      %527 = vmatprep.subr.bf16.mxu0 0
      %528 = vmatpush1.bf16.msra.mxu0 0
      %529 = vmatprep.subr.bf16.mxu0 0
      %530 = vmatpush1.bf16.msra.mxu0 0
      %531 = vmatprep.subr.bf16.mxu0 0
      %532 = vmatpush1.bf16.msra.mxu0 0
      %533 = vmatprep.subr.bf16.mxu0 0
      %534 = vmatpush1.bf16.msra.mxu0 0
      %535 = vmatprep.subr.bf16.mxu0 0
      %536 = vmatpush1.bf16.msra.mxu0 0
      %537 = vmatprep.subr.bf16.mxu0 0
      %538 = vmatpush1.bf16.msra.mxu0 0
      %539 = vmatprep.subr.bf16.mxu0 0
      %540 = vmatpush1.bf16.msra.mxu0 0
      %541 = vmatprep.subr.bf16.mxu0 0
      %542 = vmatpush1.bf16.msra.mxu0 0
      %543 = vmatprep.subr.bf16.mxu0 0
      %544 = vmatpush1.bf16.msra.mxu0 0
      %545 = vmatprep.subr.bf16.mxu0 0
      %546 = vmatpush1.bf16.msra.mxu0 0
      %547 = vmatprep.subr.bf16.mxu0 0
      %548 = vmatpush1.bf16.msra.mxu0 0
      %549 = vmatprep.subr.bf16.mxu0 0
      %550 = vmatpush1.bf16.msra.mxu0 0
      %551 = vmatprep.subr.bf16.mxu0 0
      %552 = vmatpush1.bf16.msra.mxu0 0
      %553 = vmatprep.subr.bf16.mxu0 0
      %554 = vmatpush1.bf16.msra.mxu0 0
      %555 = vmatprep.mubr.bf16.mxu0 0
      %556 = vmatmul.mubr.bf16.gmra.mrb[0].mxu0 %v521
      %v557 = vpop.f32.mrb[0].mxu0
      %v558 = vadd.f32 0.0, %v557
      %v559 = vpop.f32.mrb[0].mxu0
      %v560 = vpop.f32.mrb[0].mxu0
      %v561 = vpop.f32.mrb[0].mxu0
      %562 = vdwg.mxu0
      %vm563 = vcmask 520192
      %v564 = vsel %vm563, %v503, 0.0
      %v565 = vsel %vm563, %v558, 0.0
      %v566 = vadd.f32 %v564, %v565
      %v567 = vld [vmem:[%s2] sm:$0x1]
      %v569 = vlaneseq
      %v570 = vshrl.u32 %v569, 7
      %v571 = vsub.s32 0, %v570
      %v572 = vrot.slane %v567, %v571
      %v574 = vadd.f32 %v566, %v572
      %v575 = vld [vmem:[%s208] sm:$0x7]
      %v576 = vunpack.c.l.bf16 %v575
      %v577 = vadd.f32 %v574, %v576
      %v578 = vpack.c.bf16 %v577, %v577
      %vm579 = vcmask 518144
      %vm580 = vsmask.f32 2304
      %vm581 = vmand %vm579, %vm580
      %v582 = vld [vmem:[%s212] sm:$0x7]
      %v583 = vsel %vm581, %v578, %v582
      %584 = vst [vmem:[%s212] sm:$0x7] %v583
      %p585 = scmp.lt.s32.totalorder %s15, 1
      %s586 = scalar_select %p585, %s15, 1
      %s587 = smul.addr %s586, 4
      %s588 = scalar_lea.vmem %s4, %s587
      // Predicated region
      $region37: #{encode_image.14} parent=35 // pred_check
        %p589 = pneg %p127
      $region38: #{encode_image.14} parent=35 // pred_check_branch
        %591 = sbr.rel (%p589) target = $region40
      $region39: #{encode_image.14} parent=35 // pred_region
        _
      $region40: #{encode_image.14} parent=35 // pred_fallthru
        _
    $region36: #{encode_image.14} parent=5 // pred_fallthru
      _
    %p592 = scmp.le.s32.totalorder 2, %s10
    // Predicated region
    $region41: #{encode_image.14} parent=5 // pred_check
      %p593 = pneg %p592
    $region42: #{encode_image.14} parent=5 // pred_check_branch
      %595 = sbr.rel (%p593) target = $region44
    $region43: #{encode_image.14} parent=5 // pred_region
      %s596 = ssub.s32 %s10, 2
      // Predicated region
      $region45: #{encode_image.14} parent=43 // pred_check
        %p597 = pneg %p133
      $region46: #{encode_image.14} parent=43 // pred_check_branch
        %599 = sbr.rel (%p597) target = $region48
      $region47: #{encode_image.14} parent=43 // pred_region
        %p600 = scmp.lt.s32.totalorder %s16, 1
        %s601 = scalar_select %p600, %s16, 1
        %s602 = smul.addr %s601, 4
        %s603 = scalar_lea.vmem %s4, %s602
      $region48: #{encode_image.14} parent=43 // pred_fallthru
        _
    $region44: #{encode_image.14} parent=5 // pred_fallthru
      _
  $region6: #{encode_image.14} parent=0 // loop_footer
    %s14 = sadd.s32 1, %s10
  $region7: #{encode_image.14} parent=0 // loop_footer_branch
    %9 = sbr.rel target = $region3
  $region8: #{encode_image.14} parent=0 // loop_exit
    _

// kernel: encode_image.13
$region0: #{encode_image.13}
  #allocation0 [shape = 'u32[]', space=smem, size = 0x4, offset = 0x4, fixed_abs, tag = 'smem constant byte address 0x4 - core index']
  #allocation1 [shape = 'u32[144,128]{1,0:T(1,128)}', space=vmem, size = 0x12000, scoped, tag = 'internal scratch']
  %s0 = inlined_call_operand.vmem [shape: bf16[16,64], index: 0, kind: input, shape index: {}]
  %s1 = inlined_call_operand.vmem [shape: bf16[64,192], index: 1, kind: input, shape index: {}]
  %s2 = inlined_call_operand.vmem [shape: f32[1,64], index: 2, kind: input, shape index: {}]
  %s3 = inlined_call_operand.vmem [shape: f32[1,64], index: 3, kind: input, shape index: {}]
  %s4 = inlined_call_operand.vmem [shape: f32[1,192], index: 4, kind: input, shape index: {}]
  %s5 = inlined_call_operand.vmem [shape: bf16[16,192], index: 5, kind: output, shape index: {}]
  %s6 = sld [smem:[#allocation0]]
  $region30: #{encode_image.13} parent=0
    _
  %s8 = ssub.s32 1, %s6
  %s9 = scalar_select 0, %s8, %s6
  // Predicated region
  $region2: #{encode_image.13} parent=0 // pred_check
    _
  $region3: #{encode_image.13} parent=0 // pred_check_branch
    %11 = sbr.rel (0) target = $region5
  $region4: #{encode_image.13} parent=0 // pred_region
    _
  $region5: #{encode_image.13} parent=0 // pred_fallthru
    _
  // Predicated region
  $region6: #{encode_image.13} parent=0 // pred_check
    _
  $region7: #{encode_image.13} parent=0 // pred_check_branch
    %13 = sbr.rel (0) target = $region9
  $region8: #{encode_image.13} parent=0 // pred_region
    _
  $region9: #{encode_image.13} parent=0 // pred_fallthru
    _
  // Predicated region
  $region10: #{encode_image.13} parent=0 // pred_check
    _
  $region11: #{encode_image.13} parent=0 // pred_check_branch
    %15 = sbr.rel (0) target = $region13
  $region12: #{encode_image.13} parent=0 // pred_region
    _
  $region13: #{encode_image.13} parent=0 // pred_fallthru
    _
  // Predicated region
  $region14: #{encode_image.13} parent=0 // pred_check
    _
  $region15: #{encode_image.13} parent=0 // pred_check_branch
    %17 = sbr.rel (0) target = $region17
  $region16: #{encode_image.13} parent=0 // pred_region
    _
  $region17: #{encode_image.13} parent=0 // pred_fallthru
    _
  // Predicated region
  $region18: #{encode_image.13} parent=0 // pred_check
    _
  $region19: #{encode_image.13} parent=0 // pred_check_branch
    %19 = sbr.rel (0) target = $region21
  $region20: #{encode_image.13} parent=0 // pred_region
    _
  $region21: #{encode_image.13} parent=0 // pred_fallthru
    _
  %v21 = vld [vmem:[%s0] sm:$0xf]
  %v22 = vld [vmem:[%s0 + $0x4] sm:$0xf]
  %v23 = vunpack.c.l.bf16 %v21
  %v24 = vunpack.c.l.bf16 %v22
  %vm25 = vcmask 523264
  %v26 = vsel %vm25, %v23, 0.0
  %27 = vadd.xlane.f32.xlu0 %v26
  %v28 = vpop.xlane.xlu0 %27
  %v29 = vsel %vm25, %v24, 0.0
  %30 = vadd.xlane.f32.xlu0 %v29
  %v31 = vpop.xlane.xlu0 %30
  %v32 = vrcp.pop 64.0
  %v33 = vmul.f32 %v28, %v32
  %v34 = vmul.f32 %v31, %v32
  %v35 = vsub.f32 %v23, %v33
  %v36 = vsub.f32 %v24, %v34
  %v37 = vmul.f32 %v35, %v35
  %v38 = vmul.f32 %v36, %v36
  %v39 = vsel %vm25, %v37, 0.0
  %40 = vadd.xlane.f32.xlu0 %v39
  %v41 = vpop.xlane.xlu0 %40
  %v42 = vsel %vm25, %v38, 0.0
  %43 = vadd.xlane.f32.xlu0 %v42
  %v44 = vpop.xlane.xlu0 %43
  %v45 = vmul.f32 %v41, %v32
  %v46 = vmul.f32 %v44, %v32
  %v47 = vadd.f32 %v45, 1e-05
  %v48 = vadd.f32 %v46, 1e-05
  %v49 = vrsqrt.pop %v47
  %v50 = vrsqrt.pop %v48
  %v51 = vmul.f32 %v35, %v49
  %v52 = vmul.f32 %v36, %v50
  %v53 = vld [vmem:[%s2] sm:$0x1]
  %v55 = vlaneseq
  %v56 = vshrl.u32 %v55, 7
  %v57 = vsub.s32 0, %v56
  %v58 = vrot.slane %v53, %v57
  %v60 = vmul.f32 %v51, %v58
  %v61 = vmul.f32 %v52, %v58
  %v62 = vld [vmem:[%s3] sm:$0x1]
  %v64 = vlaneseq
  %v65 = vshrl.u32 %v64, 7
  %v66 = vsub.s32 0, %v65
  %v67 = vrot.slane %v62, %v66
  %v69 = vadd.f32 %v60, %v67
  %v70 = vadd.f32 %v61, %v67
  %v71 = vpack.c.bf16 %v70, %v69
  %v72 = vld [vmem:[%s1] sm:$0xff]
  %v73 = vld [vmem:[%s1 + $0x8] sm:$0xff]
  %v74 = vld [vmem:[%s1 + $0x10] sm:$0xff]
  %v75 = vld [vmem:[%s1 + $0x18] sm:$0xff]
  %v76 = vld [vmem:[%s1 + $0x20] sm:$0xff]
  %v77 = vld [vmem:[%s1 + $0x28] sm:$0xff]
  %v78 = vld [vmem:[%s1 + $0x30] sm:$0xff]
  %v79 = vld [vmem:[%s1 + $0x38] sm:$0xff]
  %v80 = vld [vmem:[%s4] sm:$0x3]
  %v82 = vlaneseq
  %v83 = vshrl.u32 %v82, 7
  %v84 = vsub.s32 0, %v83
  %v85 = vrot.slane %v80, %v84
  %v86 = vlaneseq
  %v87 = vshrl.u32 %v86, 7
  %v88 = vsub.s32 1, %v87
  %v89 = vrot.slane %v80, %v88
  %v100 = vunpack.c.l.b16 %v72
  %v101 = vunpack.c.h.b16 %v72
  %v102 = vunpack.c.l.b16 %v73
  %v103 = vunpack.c.h.b16 %v73
  %v104 = vunpack.c.l.b16 %v74
  %v105 = vunpack.c.h.b16 %v74
  %v106 = vunpack.c.l.b16 %v75
  %v107 = vunpack.c.h.b16 %v75
  %v108 = vunpack.c.l.b16 %v76
  %v109 = vunpack.c.h.b16 %v76
  %v110 = vunpack.c.l.b16 %v77
  %v111 = vunpack.c.h.b16 %v77
  %v112 = vunpack.c.l.b16 %v78
  %v113 = vunpack.c.h.b16 %v78
  %v114 = vunpack.c.l.b16 %v79
  %v115 = vunpack.c.h.b16 %v79
  %v116 = vpack.c.b16 %v102, %v100
  %v117 = vpack.c.b16 %v103, %v101
  %v118 = vpack.c.b16 %v106, %v104
  %v119 = vpack.c.b16 %v107, %v105
  %v120 = vpack.c.b16 %v110, %v108
  %v121 = vpack.c.b16 %v111, %v109
  %v122 = vpack.c.b16 %v114, %v112
  %v123 = vpack.c.b16 %v115, %v113
  %v133 = vsel %vm25, %v71, 0
  %135 = vmatprep.subr.bf16.mxu0 %v117
  %136 = vmatpush1.bf16.msra.mxu0 %v116
  %137 = vmatprep.subr.bf16.mxu0 %v119
  %138 = vmatpush1.bf16.msra.mxu0 %v118
  %139 = vmatprep.subr.bf16.mxu0 %v121
  %140 = vmatpush1.bf16.msra.mxu0 %v120
  %141 = vmatprep.subr.bf16.mxu0 %v123
  %142 = vmatpush1.bf16.msra.mxu0 %v122
  %143 = vmatprep.subr.bf16.mxu0 0
  %144 = vmatpush1.bf16.msra.mxu0 0
  %145 = vmatprep.subr.bf16.mxu0 0
  %146 = vmatpush1.bf16.msra.mxu0 0
  %147 = vmatprep.subr.bf16.mxu0 0
  %148 = vmatpush1.bf16.msra.mxu0 0
  %149 = vmatprep.subr.bf16.mxu0 0
  %150 = vmatpush1.bf16.msra.mxu0 0
  %151 = vmatprep.subr.bf16.mxu0 0
  %152 = vmatpush1.bf16.msra.mxu0 0
  %153 = vmatprep.subr.bf16.mxu0 0
  %154 = vmatpush1.bf16.msra.mxu0 0
  %155 = vmatprep.subr.bf16.mxu0 0
  %156 = vmatpush1.bf16.msra.mxu0 0
  %157 = vmatprep.subr.bf16.mxu0 0
  %158 = vmatpush1.bf16.msra.mxu0 0
  %159 = vmatprep.subr.bf16.mxu0 0
  %160 = vmatpush1.bf16.msra.mxu0 0
  %161 = vmatprep.subr.bf16.mxu0 0
  %162 = vmatpush1.bf16.msra.mxu0 0
  %163 = vmatprep.subr.bf16.mxu0 0
  %164 = vmatpush1.bf16.msra.mxu0 0
  %165 = vmatprep.subr.bf16.mxu0 0
  %166 = vmatpush1.bf16.msra.mxu0 0
  %167 = vmatprep.mubr.bf16.mxu0 0
  %168 = vmatmul.mubr.bf16.gmra.mrb[0].mxu0 %v133
  %v169 = vpop.f32.mrb[0].mxu0
  %v170 = vadd.f32 %v85, %v169
  %v171 = vpop.f32.mrb[0].mxu0
  %v172 = vadd.f32 %v89, %v171
  %v173 = vpop.f32.mrb[0].mxu0
  %v174 = vadd.f32 %v85, %v173
  %v175 = vpop.f32.mrb[0].mxu0
  %v176 = vadd.f32 %v89, %v175
  %177 = vdwg.mxu0
  %v178 = vpack.c.bf16 %v174, %v170
  %v179 = vpack.c.bf16 %v176, %v172
  %v182 = vunpack.c.l.b16 %v178
  %v183 = vunpack.c.l.b16 %v179
  %v184 = vunpack.c.h.b16 %v178
  %v185 = vunpack.c.h.b16 %v179
  %v186 = vpack.c.b16 %v183, %v182
  %v187 = vpack.c.b16 %v185, %v184
  %vm190 = vcmask 1043456
  %vm191 = vcmask 523268
  %vm192 = vmor %vm191, %vm190
  %193 = vst.msk [vmem:[%s5] sm:$0xff] %vm192, %v186
  %194 = vst.msk [vmem:[%s5 + $0x8] sm:$0xff] %vm192, %v187
  // Predicated region
  $region22: #{encode_image.13} parent=0 // pred_check
    _
  $region23: #{encode_image.13} parent=0 // pred_check_branch
    %196 = sbr.rel (0) target = $region25
  $region24: #{encode_image.13} parent=0 // pred_region
    _
  $region25: #{encode_image.13} parent=0 // pred_fallthru
    _
  // Predicated region
  $region26: #{encode_image.13} parent=0 // pred_check
    _
  $region27: #{encode_image.13} parent=0 // pred_check_branch
    %198 = sbr.rel (0) target = $region29
  $region28: #{encode_image.13} parent=0 // pred_region
    _
  $region29: #{encode_image.13} parent=0 // pred_fallthru
    _

// kernel: encode_image.15
$region0: #{encode_image.15}
  #allocation0 [shape = 'u32[]', space=smem, size = 0x4, offset = 0x4, fixed_abs, tag = 'smem constant byte address 0x4 - core index']
  #allocation1 [shape = 'u32[144,128]{1,0:T(1,128)}', space=vmem, size = 0x12000, scoped, tag = 'internal scratch']
  %s0 = inlined_call_operand.vmem [shape: bf16[16,64], index: 0, kind: input, shape index: {}]
  %s1 = inlined_call_operand.vmem [shape: bf16[64,256], index: 1, kind: input, shape index: {}]
  %s2 = inlined_call_operand.vmem [shape: f32[1,64], index: 2, kind: input, shape index: {}]
  %s3 = inlined_call_operand.vmem [shape: f32[1,64], index: 3, kind: input, shape index: {}]
  %s4 = inlined_call_operand.vmem [shape: f32[1,256], index: 4, kind: input, shape index: {}]
  %s5 = inlined_call_operand.vmem [shape: bf16[16,256], index: 5, kind: output, shape index: {}]
  %s6 = sld [smem:[#allocation0]]
  $region30: #{encode_image.15} parent=0
    _
  %s8 = ssub.s32 1, %s6
  %s9 = scalar_select 0, %s8, %s6
  // Predicated region
  $region2: #{encode_image.15} parent=0 // pred_check
    _
  $region3: #{encode_image.15} parent=0 // pred_check_branch
    %11 = sbr.rel (0) target = $region5
  $region4: #{encode_image.15} parent=0 // pred_region
    _
  $region5: #{encode_image.15} parent=0 // pred_fallthru
    _
  // Predicated region
  $region6: #{encode_image.15} parent=0 // pred_check
    _
  $region7: #{encode_image.15} parent=0 // pred_check_branch
    %13 = sbr.rel (0) target = $region9
  $region8: #{encode_image.15} parent=0 // pred_region
    _
  $region9: #{encode_image.15} parent=0 // pred_fallthru
    _
  // Predicated region
  $region10: #{encode_image.15} parent=0 // pred_check
    _
  $region11: #{encode_image.15} parent=0 // pred_check_branch
    %15 = sbr.rel (0) target = $region13
  $region12: #{encode_image.15} parent=0 // pred_region
    _
  $region13: #{encode_image.15} parent=0 // pred_fallthru
    _
  // Predicated region
  $region14: #{encode_image.15} parent=0 // pred_check
    _
  $region15: #{encode_image.15} parent=0 // pred_check_branch
    %17 = sbr.rel (0) target = $region17
  $region16: #{encode_image.15} parent=0 // pred_region
    _
  $region17: #{encode_image.15} parent=0 // pred_fallthru
    _
  // Predicated region
  $region18: #{encode_image.15} parent=0 // pred_check
    _
  $region19: #{encode_image.15} parent=0 // pred_check_branch
    %19 = sbr.rel (0) target = $region21
  $region20: #{encode_image.15} parent=0 // pred_region
    _
  $region21: #{encode_image.15} parent=0 // pred_fallthru
    _
  %v21 = vld [vmem:[%s0] sm:$0xf]
  %v22 = vld [vmem:[%s0 + $0x4] sm:$0xf]
  %v23 = vunpack.c.l.bf16 %v21
  %v24 = vunpack.c.l.bf16 %v22
  %vm25 = vcmask 523264
  %v26 = vsel %vm25, %v23, 0.0
  %27 = vadd.xlane.f32.xlu0 %v26
  %v28 = vpop.xlane.xlu0 %27
  %v29 = vsel %vm25, %v24, 0.0
  %30 = vadd.xlane.f32.xlu0 %v29
  %v31 = vpop.xlane.xlu0 %30
  %v32 = vrcp.pop 64.0
  %v33 = vmul.f32 %v28, %v32
  %v34 = vmul.f32 %v31, %v32
  %v35 = vsub.f32 %v23, %v33
  %v36 = vsub.f32 %v24, %v34
  %v37 = vmul.f32 %v35, %v35
  %v38 = vmul.f32 %v36, %v36
  %v39 = vsel %vm25, %v37, 0.0
  %40 = vadd.xlane.f32.xlu0 %v39
  %v41 = vpop.xlane.xlu0 %40
  %v42 = vsel %vm25, %v38, 0.0
  %43 = vadd.xlane.f32.xlu0 %v42
  %v44 = vpop.xlane.xlu0 %43
  %v45 = vmul.f32 %v41, %v32
  %v46 = vmul.f32 %v44, %v32
  %v47 = vadd.f32 %v45, 1e-05
  %v48 = vadd.f32 %v46, 1e-05
  %v49 = vrsqrt.pop %v47
  %v50 = vrsqrt.pop %v48
  %v51 = vmul.f32 %v35, %v49
  %v52 = vmul.f32 %v36, %v50
  %v53 = vld [vmem:[%s2] sm:$0x1]
  %v55 = vlaneseq
  %v56 = vshrl.u32 %v55, 7
  %v57 = vsub.s32 0, %v56
  %v58 = vrot.slane %v53, %v57
  %v60 = vmul.f32 %v51, %v58
  %v61 = vmul.f32 %v52, %v58
  %v62 = vld [vmem:[%s3] sm:$0x1]
  %v64 = vlaneseq
  %v65 = vshrl.u32 %v64, 7
  %v66 = vsub.s32 0, %v65
  %v67 = vrot.slane %v62, %v66
  %v69 = vadd.f32 %v60, %v67
  %v70 = vadd.f32 %v61, %v67
  %v71 = vpack.c.bf16 %v70, %v69
  %v72 = vld [vmem:[%s1] sm:$0xff]
  %v73 = vld [vmem:[%s1 + $0x8] sm:$0xff]
  %v74 = vld [vmem:[%s1 + $0x10] sm:$0xff]
  %v75 = vld [vmem:[%s1 + $0x18] sm:$0xff]
  %v76 = vld [vmem:[%s1 + $0x20] sm:$0xff]
  %v77 = vld [vmem:[%s1 + $0x28] sm:$0xff]
  %v78 = vld [vmem:[%s1 + $0x30] sm:$0xff]
  %v79 = vld [vmem:[%s1 + $0x38] sm:$0xff]
  %v80 = vld [vmem:[%s4] sm:$0x3]
  %v82 = vlaneseq
  %v83 = vshrl.u32 %v82, 7
  %v84 = vsub.s32 0, %v83
  %v85 = vrot.slane %v80, %v84
  %v86 = vlaneseq
  %v87 = vshrl.u32 %v86, 7
  %v88 = vsub.s32 1, %v87
  %v89 = vrot.slane %v80, %v88
  %v100 = vunpack.c.l.b16 %v72
  %v101 = vunpack.c.h.b16 %v72
  %v102 = vunpack.c.l.b16 %v73
  %v103 = vunpack.c.h.b16 %v73
  %v104 = vunpack.c.l.b16 %v74
  %v105 = vunpack.c.h.b16 %v74
  %v106 = vunpack.c.l.b16 %v75
  %v107 = vunpack.c.h.b16 %v75
  %v108 = vunpack.c.l.b16 %v76
  %v109 = vunpack.c.h.b16 %v76
  %v110 = vunpack.c.l.b16 %v77
  %v111 = vunpack.c.h.b16 %v77
  %v112 = vunpack.c.l.b16 %v78
  %v113 = vunpack.c.h.b16 %v78
  %v114 = vunpack.c.l.b16 %v79
  %v115 = vunpack.c.h.b16 %v79
  %v116 = vpack.c.b16 %v102, %v100
  %v117 = vpack.c.b16 %v103, %v101
  %v118 = vpack.c.b16 %v106, %v104
  %v119 = vpack.c.b16 %v107, %v105
  %v120 = vpack.c.b16 %v110, %v108
  %v121 = vpack.c.b16 %v111, %v109
  %v122 = vpack.c.b16 %v114, %v112
  %v123 = vpack.c.b16 %v115, %v113
  %v133 = vsel %vm25, %v71, 0
  %135 = vmatprep.subr.bf16.mxu0 %v117
  %136 = vmatpush1.bf16.msra.mxu0 %v116
  %137 = vmatprep.subr.bf16.mxu0 %v119
  %138 = vmatpush1.bf16.msra.mxu0 %v118
  %139 = vmatprep.subr.bf16.mxu0 %v121
  %140 = vmatpush1.bf16.msra.mxu0 %v120
  %141 = vmatprep.subr.bf16.mxu0 %v123
  %142 = vmatpush1.bf16.msra.mxu0 %v122
  %143 = vmatprep.subr.bf16.mxu0 0
  %144 = vmatpush1.bf16.msra.mxu0 0
  %145 = vmatprep.subr.bf16.mxu0 0
  %146 = vmatpush1.bf16.msra.mxu0 0
  %147 = vmatprep.subr.bf16.mxu0 0
  %148 = vmatpush1.bf16.msra.mxu0 0
  %149 = vmatprep.subr.bf16.mxu0 0
  %150 = vmatpush1.bf16.msra.mxu0 0
  %151 = vmatprep.subr.bf16.mxu0 0
  %152 = vmatpush1.bf16.msra.mxu0 0
  %153 = vmatprep.subr.bf16.mxu0 0
  %154 = vmatpush1.bf16.msra.mxu0 0
  %155 = vmatprep.subr.bf16.mxu0 0
  %156 = vmatpush1.bf16.msra.mxu0 0
  %157 = vmatprep.subr.bf16.mxu0 0
  %158 = vmatpush1.bf16.msra.mxu0 0
  %159 = vmatprep.subr.bf16.mxu0 0
  %160 = vmatpush1.bf16.msra.mxu0 0
  %161 = vmatprep.subr.bf16.mxu0 0
  %162 = vmatpush1.bf16.msra.mxu0 0
  %163 = vmatprep.subr.bf16.mxu0 0
  %164 = vmatpush1.bf16.msra.mxu0 0
  %165 = vmatprep.subr.bf16.mxu0 0
  %166 = vmatpush1.bf16.msra.mxu0 0
  %167 = vmatprep.mubr.bf16.mxu0 0
  %168 = vmatmul.mubr.bf16.gmra.mrb[0].mxu0 %v133
  %v169 = vpop.f32.mrb[0].mxu0
  %v170 = vadd.f32 %v85, %v169
  %v171 = vpop.f32.mrb[0].mxu0
  %v172 = vadd.f32 %v89, %v171
  %v173 = vpop.f32.mrb[0].mxu0
  %v174 = vadd.f32 %v85, %v173
  %v175 = vpop.f32.mrb[0].mxu0
  %v176 = vadd.f32 %v89, %v175
  %177 = vdwg.mxu0
  %v178 = vmul.f32 %v170, 1.702
  %v179 = vmul.f32 %v172, 1.702
  %v180 = vmul.f32 %v174, 1.702
  %v181 = vmul.f32 %v176, 1.702
  %v182 = vxor.u32 %v178, 2147483648
  %v183 = vxor.u32 %v179, 2147483648
  %v184 = vxor.u32 %v180, 2147483648
  %v185 = vxor.u32 %v181, 2147483648
  %v186 = vmul.f32 %v182, 1.442695
  %v187 = vpow.pop %v186
  %v188 = vmul.f32 %v183, 1.442695
  %v189 = vpow.pop %v188
  %v190 = vmul.f32 %v184, 1.442695
  %v191 = vpow.pop %v190
  %v192 = vmul.f32 %v185, 1.442695
  %v193 = vpow.pop %v192
  %v194 = vadd.f32 %v187, 1.0
  %v195 = vadd.f32 %v189, 1.0
  %v196 = vadd.f32 %v191, 1.0
  %v197 = vadd.f32 %v193, 1.0
  %v198 = vrcp.pop %v194
  %v199 = vmul.f32 1.0, %v198
  %v200 = vrcp.pop %v195
  %v201 = vmul.f32 1.0, %v200
  %v202 = vrcp.pop %v196
  %v203 = vmul.f32 1.0, %v202
  %v204 = vrcp.pop %v197
  %v205 = vmul.f32 1.0, %v204
  %v206 = vmul.f32 %v170, %v199
  %v207 = vmul.f32 %v172, %v201
  %v208 = vmul.f32 %v174, %v203
  %v209 = vmul.f32 %v176, %v205
  %v210 = vpack.c.bf16 %v208, %v206
  %v211 = vpack.c.bf16 %v209, %v207
  %v214 = vunpack.c.l.b16 %v210
  %v215 = vunpack.c.l.b16 %v211
  %v216 = vunpack.c.h.b16 %v210
  %v217 = vunpack.c.h.b16 %v211
  %v218 = vpack.c.b16 %v215, %v214
  %v219 = vpack.c.b16 %v217, %v216
  %222 = vst [vmem:[%s5] sm:$0xff] %v218
  %223 = vst [vmem:[%s5 + $0x8] sm:$0xff] %v219
  // Predicated region
  $region22: #{encode_image.15} parent=0 // pred_check
    _
  $region23: #{encode_image.15} parent=0 // pred_check_branch
    %225 = sbr.rel (0) target = $region25
  $region24: #{encode_image.15} parent=0 // pred_region
    _
  $region25: #{encode_image.15} parent=0 // pred_fallthru
    _
  // Predicated region
  $region26: #{encode_image.15} parent=0 // pred_check
    _
  $region27: #{encode_image.15} parent=0 // pred_check_branch
    %227 = sbr.rel (0) target = $region29
  $region28: #{encode_image.15} parent=0 // pred_region
    _
  $region29: #{encode_image.15} parent=0 // pred_fallthru
    _

// kernel: encode_image.16
$region0: #{encode_image.16}
  #allocation0 [shape = 'u32[]', space=smem, size = 0x4, offset = 0x4, fixed_abs, tag = 'smem constant byte address 0x4 - core index']
  #allocation1 [shape = 'u32[144,128]{1,0:T(1,128)}', space=vmem, size = 0x12000, scoped, tag = 'internal scratch']
  %s0 = inlined_call_operand.vmem [shape: bf16[16,256], index: 0, kind: input, shape index: {}]
  %s1 = inlined_call_operand.vmem [shape: bf16[256,64], index: 1, kind: input, shape index: {}]
  %s2 = inlined_call_operand.vmem [shape: f32[1,64], index: 2, kind: input, shape index: {}]
  %s3 = inlined_call_operand.vmem [shape: bf16[16,64], index: 3, kind: input, shape index: {}]
  %s4 = inlined_call_operand.vmem [shape: bf16[16,64], index: 4, kind: output, shape index: {}]
  %s5 = sld [smem:[#allocation0]]
  $region26: #{encode_image.16} parent=0
    _
  %s7 = ssub.s32 1, %s5
  %s8 = scalar_select 0, %s7, %s5
  // Predicated region
  $region2: #{encode_image.16} parent=0 // pred_check
    _
  $region3: #{encode_image.16} parent=0 // pred_check_branch
    %10 = sbr.rel (0) target = $region5
  $region4: #{encode_image.16} parent=0 // pred_region
    _
  $region5: #{encode_image.16} parent=0 // pred_fallthru
    _
  // Predicated region
  $region6: #{encode_image.16} parent=0 // pred_check
    _
  $region7: #{encode_image.16} parent=0 // pred_check_branch
    %12 = sbr.rel (0) target = $region9
  $region8: #{encode_image.16} parent=0 // pred_region
    _
  $region9: #{encode_image.16} parent=0 // pred_fallthru
    _
  // Predicated region
  $region10: #{encode_image.16} parent=0 // pred_check
    _
  $region11: #{encode_image.16} parent=0 // pred_check_branch
    %14 = sbr.rel (0) target = $region13
  $region12: #{encode_image.16} parent=0 // pred_region
    _
  $region13: #{encode_image.16} parent=0 // pred_fallthru
    _
  // Predicated region
  $region14: #{encode_image.16} parent=0 // pred_check
    _
  $region15: #{encode_image.16} parent=0 // pred_check_branch
    %16 = sbr.rel (0) target = $region17
  $region16: #{encode_image.16} parent=0 // pred_region
    _
  $region17: #{encode_image.16} parent=0 // pred_fallthru
    _
  %v18 = vld [vmem:[%s0] sm:$0xff]
  %v19 = vld [vmem:[%s0 + $0x8] sm:$0xff]
  %v20 = vld [vmem:[%s1] sm:$0xf]
  %v21 = vld [vmem:[%s1 + $0x4] sm:$0xf]
  %v22 = vld [vmem:[%s1 + $0x8] sm:$0xf]
  %v23 = vld [vmem:[%s1 + $0xc] sm:$0xf]
  %v24 = vld [vmem:[%s1 + $0x10] sm:$0xf]
  %v25 = vld [vmem:[%s1 + $0x14] sm:$0xf]
  %v26 = vld [vmem:[%s1 + $0x18] sm:$0xf]
  %v27 = vld [vmem:[%s1 + $0x1c] sm:$0xf]
  %v28 = vld [vmem:[%s1 + $0x20] sm:$0xf]
  %v29 = vld [vmem:[%s1 + $0x24] sm:$0xf]
  %v30 = vld [vmem:[%s1 + $0x28] sm:$0xf]
  %v31 = vld [vmem:[%s1 + $0x2c] sm:$0xf]
  %v32 = vld [vmem:[%s1 + $0x30] sm:$0xf]
  %v33 = vld [vmem:[%s1 + $0x34] sm:$0xf]
  %v34 = vld [vmem:[%s1 + $0x38] sm:$0xf]
  %v35 = vld [vmem:[%s1 + $0x3c] sm:$0xf]
  %v36 = vld [vmem:[%s1 + $0x40] sm:$0xf]
  %v37 = vld [vmem:[%s1 + $0x44] sm:$0xf]
  %v38 = vld [vmem:[%s1 + $0x48] sm:$0xf]
  %v39 = vld [vmem:[%s1 + $0x4c] sm:$0xf]
  %v40 = vld [vmem:[%s1 + $0x50] sm:$0xf]
  %v41 = vld [vmem:[%s1 + $0x54] sm:$0xf]
  %v42 = vld [vmem:[%s1 + $0x58] sm:$0xf]
  %v43 = vld [vmem:[%s1 + $0x5c] sm:$0xf]
  %v44 = vld [vmem:[%s1 + $0x60] sm:$0xf]
  %v45 = vld [vmem:[%s1 + $0x64] sm:$0xf]
  %v46 = vld [vmem:[%s1 + $0x68] sm:$0xf]
  %v47 = vld [vmem:[%s1 + $0x6c] sm:$0xf]
  %v48 = vld [vmem:[%s1 + $0x70] sm:$0xf]
  %v49 = vld [vmem:[%s1 + $0x74] sm:$0xf]
  %v50 = vld [vmem:[%s1 + $0x78] sm:$0xf]
  %v51 = vld [vmem:[%s1 + $0x7c] sm:$0xf]
  %v52 = vld [vmem:[%s2] sm:$0x1]
  %v54 = vlaneseq
  %v55 = vshrl.u32 %v54, 7
  %v56 = vsub.s32 0, %v55
  %v57 = vrot.slane %v52, %v56
  %v61 = vunpack.c.l.b16 %v18
  %v62 = vunpack.c.h.b16 %v18
  %v63 = vunpack.c.l.b16 %v19
  %v64 = vunpack.c.h.b16 %v19
  %v65 = vpack.c.b16 %v63, %v61
  %v66 = vpack.c.b16 %v64, %v62
  %v101 = vunpack.c.l.b16 %v20
  %v102 = vunpack.c.l.b16 %v21
  %v103 = vunpack.c.l.b16 %v22
  %v104 = vunpack.c.l.b16 %v23
  %v105 = vunpack.c.l.b16 %v24
  %v106 = vunpack.c.l.b16 %v25
  %v107 = vunpack.c.l.b16 %v26
  %v108 = vunpack.c.l.b16 %v27
  %v109 = vunpack.c.l.b16 %v28
  %v110 = vunpack.c.l.b16 %v29
  %v111 = vunpack.c.l.b16 %v30
  %v112 = vunpack.c.l.b16 %v31
  %v113 = vunpack.c.l.b16 %v32
  %v114 = vunpack.c.l.b16 %v33
  %v115 = vunpack.c.l.b16 %v34
  %v116 = vunpack.c.l.b16 %v35
  %v117 = vunpack.c.l.b16 %v36
  %v118 = vunpack.c.l.b16 %v37
  %v119 = vunpack.c.l.b16 %v38
  %v120 = vunpack.c.l.b16 %v39
  %v121 = vunpack.c.l.b16 %v40
  %v122 = vunpack.c.l.b16 %v41
  %v123 = vunpack.c.l.b16 %v42
  %v124 = vunpack.c.l.b16 %v43
  %v125 = vunpack.c.l.b16 %v44
  %v126 = vunpack.c.l.b16 %v45
  %v127 = vunpack.c.l.b16 %v46
  %v128 = vunpack.c.l.b16 %v47
  %v129 = vunpack.c.l.b16 %v48
  %v130 = vunpack.c.l.b16 %v49
  %v131 = vunpack.c.l.b16 %v50
  %v132 = vunpack.c.l.b16 %v51
  %v133 = vpack.c.b16 %v102, %v101
  %v134 = vpack.c.b16 %v104, %v103
  %v135 = vpack.c.b16 %v106, %v105
  %v136 = vpack.c.b16 %v108, %v107
  %v137 = vpack.c.b16 %v110, %v109
  %v138 = vpack.c.b16 %v112, %v111
  %v139 = vpack.c.b16 %v114, %v113
  %v140 = vpack.c.b16 %v116, %v115
  %v141 = vpack.c.b16 %v118, %v117
  %v142 = vpack.c.b16 %v120, %v119
  %v143 = vpack.c.b16 %v122, %v121
  %v144 = vpack.c.b16 %v124, %v123
  %v145 = vpack.c.b16 %v126, %v125
  %v146 = vpack.c.b16 %v128, %v127
  %v147 = vpack.c.b16 %v130, %v129
  %v148 = vpack.c.b16 %v132, %v131
  %165 = vmatprep.subr.bf16.mxu0 0
  %166 = vmatpush1.bf16.msra.mxu0 %v133
  %167 = vmatprep.subr.bf16.mxu0 0
  %168 = vmatpush1.bf16.msra.mxu0 %v134
  %169 = vmatprep.subr.bf16.mxu0 0
  %170 = vmatpush1.bf16.msra.mxu0 %v135
  %171 = vmatprep.subr.bf16.mxu0 0
  %172 = vmatpush1.bf16.msra.mxu0 %v136
  %173 = vmatprep.subr.bf16.mxu0 0
  %174 = vmatpush1.bf16.msra.mxu0 %v137
  %175 = vmatprep.subr.bf16.mxu0 0
  %176 = vmatpush1.bf16.msra.mxu0 %v138
  %177 = vmatprep.subr.bf16.mxu0 0
  %178 = vmatpush1.bf16.msra.mxu0 %v139
  %179 = vmatprep.subr.bf16.mxu0 0
  %180 = vmatpush1.bf16.msra.mxu0 %v140
  %181 = vmatprep.subr.bf16.mxu0 0
  %182 = vmatpush1.bf16.msra.mxu0 %v141
  %183 = vmatprep.subr.bf16.mxu0 0
  %184 = vmatpush1.bf16.msra.mxu0 %v142
  %185 = vmatprep.subr.bf16.mxu0 0
  %186 = vmatpush1.bf16.msra.mxu0 %v143
  %187 = vmatprep.subr.bf16.mxu0 0
  %188 = vmatpush1.bf16.msra.mxu0 %v144
  %189 = vmatprep.subr.bf16.mxu0 0
  %190 = vmatpush1.bf16.msra.mxu0 %v145
  %191 = vmatprep.subr.bf16.mxu0 0
  %192 = vmatpush1.bf16.msra.mxu0 %v146
  %193 = vmatprep.subr.bf16.mxu0 0
  %194 = vmatpush1.bf16.msra.mxu0 %v147
  %195 = vmatprep.subr.bf16.mxu0 0
  %196 = vmatpush1.bf16.msra.mxu0 %v148
  %197 = vmatprep.mubr.bf16.mxu0 %v66
  %198 = vmatmul.mubr.bf16.gmra.mrb[0].mxu0 %v65
  %v199 = vpop.f32.mrb[0].mxu0
  %v200 = vadd.f32 %v57, %v199
  %v201 = vpop.f32.mrb[0].mxu0
  %v202 = vpop.f32.mrb[0].mxu0
  %v203 = vadd.f32 %v57, %v202
  %v204 = vpop.f32.mrb[0].mxu0
  %205 = vdwg.mxu0
  %v206 = vld [vmem:[%s3] sm:$0xf]
  %v207 = vld [vmem:[%s3 + $0x4] sm:$0xf]
  %v208 = vunpack.c.l.bf16 %v206
  %v209 = vunpack.c.l.bf16 %v207
  %v210 = vadd.f32 %v200, %v208
  %v211 = vadd.f32 %v203, %v209
  %v212 = vpack.c.bf16 %v211, %v210
  %v214 = vunpack.c.l.b16 %v212
  %v215 = vunpack.c.h.b16 %v212
  %v216 = vpack.c.b16 %v214, %v214
  %v217 = vpack.c.b16 %v215, %v215
  %vm220 = vcmask 519168
  %221 = vst.msk [vmem:[%s4] sm:$0xf] %vm220, %v216
  %222 = vst.msk [vmem:[%s4 + $0x4] sm:$0xf] %vm220, %v217
  // Predicated region
  $region18: #{encode_image.16} parent=0 // pred_check
    _
  $region19: #{encode_image.16} parent=0 // pred_check_branch
    %224 = sbr.rel (0) target = $region21
  $region20: #{encode_image.16} parent=0 // pred_region
    _
  $region21: #{encode_image.16} parent=0 // pred_fallthru
    _
  // Predicated region
  $region22: #{encode_image.16} parent=0 // pred_check
    _
  $region23: #{encode_image.16} parent=0 // pred_check_branch
    %226 = sbr.rel (0) target = $region25
  $region24: #{encode_image.16} parent=0 // pred_region
    _
  $region25: #{encode_image.16} parent=0 // pred_fallthru
    _

// kernel: encode_image.21
$region0: #{encode_image.21}
  #allocation0 [shape = 'u32[]', space=smem, size = 0x4, offset = 0x4, fixed_abs, tag = 'smem constant byte address 0x4 - core index']
  #allocation1 [shape = 'u32[144,128]{1,0:T(1,128)}', space=vmem, size = 0x12000, scoped, tag = 'internal scratch']
  %s0 = inlined_call_operand.vmem [shape: bf16[8,64], index: 0, kind: input, shape index: {}]
  %s1 = inlined_call_operand.vmem [shape: bf16[64,32], index: 1, kind: input, shape index: {}]
  %s2 = inlined_call_operand.vmem [shape: f32[1,64], index: 2, kind: input, shape index: {}]
  %s3 = inlined_call_operand.vmem [shape: f32[1,64], index: 3, kind: input, shape index: {}]
  %s4 = inlined_call_operand.vmem [shape: f32[8,32], index: 4, kind: output, shape index: {}]
  %s5 = sld [smem:[#allocation0]]
  $region26: #{encode_image.21} parent=0
    _
  %s7 = ssub.s32 1, %s5
  %s8 = scalar_select 0, %s7, %s5
  // Predicated region
  $region2: #{encode_image.21} parent=0 // pred_check
    _
  $region3: #{encode_image.21} parent=0 // pred_check_branch
    %10 = sbr.rel (0) target = $region5
  $region4: #{encode_image.21} parent=0 // pred_region
    _
  $region5: #{encode_image.21} parent=0 // pred_fallthru
    _
  // Predicated region
  $region6: #{encode_image.21} parent=0 // pred_check
    _
  $region7: #{encode_image.21} parent=0 // pred_check_branch
    %12 = sbr.rel (0) target = $region9
  $region8: #{encode_image.21} parent=0 // pred_region
    _
  $region9: #{encode_image.21} parent=0 // pred_fallthru
    _
  // Predicated region
  $region10: #{encode_image.21} parent=0 // pred_check
    _
  $region11: #{encode_image.21} parent=0 // pred_check_branch
    %14 = sbr.rel (0) target = $region13
  $region12: #{encode_image.21} parent=0 // pred_region
    _
  $region13: #{encode_image.21} parent=0 // pred_fallthru
    _
  // Predicated region
  $region14: #{encode_image.21} parent=0 // pred_check
    _
  $region15: #{encode_image.21} parent=0 // pred_check_branch
    %16 = sbr.rel (0) target = $region17
  $region16: #{encode_image.21} parent=0 // pred_region
    _
  $region17: #{encode_image.21} parent=0 // pred_fallthru
    _
  %v18 = vld [vmem:[%s0] sm:$0xf]
  %v19 = vunpack.c.l.bf16 %v18
  %vm20 = vcmask 523264
  %v21 = vsel %vm20, %v19, 0.0
  %22 = vadd.xlane.f32.xlu0 %v21
  %v23 = vpop.xlane.xlu0 %22
  %v24 = vrcp.pop 64.0
  %v25 = vmul.f32 %v23, %v24
  %v26 = vsub.f32 %v19, %v25
  %v27 = vmul.f32 %v26, %v26
  %v28 = vsel %vm20, %v27, 0.0
  %29 = vadd.xlane.f32.xlu0 %v28
  %v30 = vpop.xlane.xlu0 %29
  %v31 = vmul.f32 %v30, %v24
  %v32 = vadd.f32 %v31, 1e-05
  %v33 = vrsqrt.pop %v32
  %v34 = vmul.f32 %v26, %v33
  %v35 = vld [vmem:[%s2] sm:$0x1]
  %v37 = vlaneseq
  %v38 = vshrl.u32 %v37, 7
  %v39 = vsub.s32 0, %v38
  %v40 = vrot.slane %v35, %v39
  %v42 = vmul.f32 %v34, %v40
  %v43 = vld [vmem:[%s3] sm:$0x1]
  %v45 = vlaneseq
  %v46 = vshrl.u32 %v45, 7
  %v47 = vsub.s32 0, %v46
  %v48 = vrot.slane %v43, %v47
  %v50 = vadd.f32 %v42, %v48
  %v51 = vpack.c.bf16 %v50, %v50
  %v52 = vld [vmem:[%s1] sm:$0xf]
  %v53 = vld [vmem:[%s1 + $0x4] sm:$0xf]
  %v54 = vld [vmem:[%s1 + $0x8] sm:$0xf]
  %v55 = vld [vmem:[%s1 + $0xc] sm:$0xf]
  %v56 = vld [vmem:[%s1 + $0x10] sm:$0xf]
  %v57 = vld [vmem:[%s1 + $0x14] sm:$0xf]
  %v58 = vld [vmem:[%s1 + $0x18] sm:$0xf]
  %v59 = vld [vmem:[%s1 + $0x1c] sm:$0xf]
  %v68 = vunpack.c.l.b16 %v52
  %v69 = vunpack.c.l.b16 %v53
  %v70 = vunpack.c.l.b16 %v54
  %v71 = vunpack.c.l.b16 %v55
  %v72 = vunpack.c.l.b16 %v56
  %v73 = vunpack.c.l.b16 %v57
  %v74 = vunpack.c.l.b16 %v58
  %v75 = vunpack.c.l.b16 %v59
  %v76 = vpack.c.b16 %v69, %v68
  %v77 = vpack.c.b16 %v71, %v70
  %v78 = vpack.c.b16 %v73, %v72
  %v79 = vpack.c.b16 %v75, %v74
  %v85 = vsel %vm20, %v51, 0
  %87 = vmatprep.subr.bf16.mxu0 0
  %88 = vmatpush1.bf16.msra.mxu0 %v76
  %89 = vmatprep.subr.bf16.mxu0 0
  %90 = vmatpush1.bf16.msra.mxu0 %v77
  %91 = vmatprep.subr.bf16.mxu0 0
  %92 = vmatpush1.bf16.msra.mxu0 %v78
  %93 = vmatprep.subr.bf16.mxu0 0
  %94 = vmatpush1.bf16.msra.mxu0 %v79
  %95 = vmatprep.subr.bf16.mxu0 0
  %96 = vmatpush1.bf16.msra.mxu0 0
  %97 = vmatprep.subr.bf16.mxu0 0
  %98 = vmatpush1.bf16.msra.mxu0 0
  %99 = vmatprep.subr.bf16.mxu0 0
  %100 = vmatpush1.bf16.msra.mxu0 0
  %101 = vmatprep.subr.bf16.mxu0 0
  %102 = vmatpush1.bf16.msra.mxu0 0
  %103 = vmatprep.subr.bf16.mxu0 0
  %104 = vmatpush1.bf16.msra.mxu0 0
  %105 = vmatprep.subr.bf16.mxu0 0
  %106 = vmatpush1.bf16.msra.mxu0 0
  %107 = vmatprep.subr.bf16.mxu0 0
  %108 = vmatpush1.bf16.msra.mxu0 0
  %109 = vmatprep.subr.bf16.mxu0 0
  %110 = vmatpush1.bf16.msra.mxu0 0
  %111 = vmatprep.subr.bf16.mxu0 0
  %112 = vmatpush1.bf16.msra.mxu0 0
  %113 = vmatprep.subr.bf16.mxu0 0
  %114 = vmatpush1.bf16.msra.mxu0 0
  %115 = vmatprep.subr.bf16.mxu0 0
  %116 = vmatpush1.bf16.msra.mxu0 0
  %117 = vmatprep.subr.bf16.mxu0 0
  %118 = vmatpush1.bf16.msra.mxu0 0
  %119 = vmatprep.mubr.bf16.mxu0 0
  %120 = vmatmul.mubr.bf16.gmra.mrb[0].mxu0 %v85
  %v121 = vpop.f32.mrb[0].mxu0
  %v122 = vadd.f32 0.0, %v121
  %v123 = vpop.f32.mrb[0].mxu0
  %v124 = vpop.f32.mrb[0].mxu0
  %v125 = vpop.f32.mrb[0].mxu0
  %126 = vdwg.mxu0
  %vm127 = vcmask 261120
  %128 = vst.msk [vmem:[%s4] sm:$0xff] %vm127, %v122
  // Predicated region
  $region18: #{encode_image.21} parent=0 // pred_check
    _
  $region19: #{encode_image.21} parent=0 // pred_check_branch
    %130 = sbr.rel (0) target = $region21
  $region20: #{encode_image.21} parent=0 // pred_region
    _
  $region21: #{encode_image.21} parent=0 // pred_fallthru
    _
  // Predicated region
  $region22: #{encode_image.21} parent=0 // pred_check
    _
  $region23: #{encode_image.21} parent=0 // pred_check_branch
    %132 = sbr.rel (0) target = $region25
  $region24: #{encode_image.21} parent=0 // pred_region
    _
  $region25: #{encode_image.21} parent=0 // pred_fallthru
    _

</llo_original>
